<compile_context>
chip_gen: v7x
topology: tpu7x:2x2x1
jax: 0.10.0
libtpu: 0.0.40
codegen_flags: <defaults>
</compile_context>

<pallas_src>
import functools

import jax
import jax.numpy as jnp
from jax.experimental import pallas as pl
from jax.experimental.pallas import tpu as pltpu

LEAKY_SLOPE = 0.01  # nn.LeakyReLU default negative_slope
BN_EPS = 1e-5       # nn.BatchNorm2d default eps


# ----------------------------------------------------------------------------
# Fused BasicBlock kernel (nb batch images per grid step).
# ----------------------------------------------------------------------------
def _dilated_conv3x3(pad_ref, g_ref, H, d):
    """sum_ky pad[ky*d : ky*d+H, :] @ G_ky  on the lane-dense (rows, W*C)
    layout; the W-direction taps + zero padding live in the banded G."""
    acc = jnp.dot(pad_ref[0:H, :], g_ref[0], preferred_element_type=jnp.float32)
    for ky in (1, 2):
        acc = acc + jnp.dot(pad_ref[ky * d:ky * d + H, :], g_ref[ky],
                            preferred_element_type=jnp.float32)
    return acc


def _basic_block_kernel(x_ref, g1_ref, g2_ref, ss_ref, out_ref,
                        xpad_ref, hpad_ref, *, H, WC, d0, d1, nb):
    # Per-channel BN scale/shift, pre-tiled to the (w*C + c) lane layout.
    s1 = ss_ref[0:1, :]
    t1 = ss_ref[1:2, :]
    s2 = ss_ref[2:3, :]
    t2 = ss_ref[3:4, :]

    # Halo-only zeroing: just the top/bottom d rows of each row-padded scratch.
    # Re-done every grid step (cheap; safe when the parallel batch axis is
    # split across TensorCores).  There is no lane halo to zero at all: the
    # left/right conv padding is encoded as zero rows of the banded weights.
    xpad_ref[0:d0, :] = jnp.zeros((d0, WC), xpad_ref.dtype)
    xpad_ref[d0 + H:2 * d0 + H, :] = jnp.zeros((d0, WC), xpad_ref.dtype)
    hpad_ref[0:d1, :] = jnp.zeros((d1, WC), hpad_ref.dtype)
    hpad_ref[d1 + H:2 * d1 + H, :] = jnp.zeros((d1, WC), hpad_ref.dtype)

    for i in range(nb):
        x = x_ref[i]                                   # (H, W*C) f32; also the residual
        xpad_ref[d0:d0 + H, :] = x.astype(xpad_ref.dtype)   # aligned, unmasked store

        # ---- conv_block1: conv3x3(dilation d0) + BN1 + LeakyReLU ------------
        acc = _dilated_conv3x3(xpad_ref, g1_ref, H, d0)
        h = acc * s1 + t1                              # BN1 (conv bias folded in)
        h = jnp.maximum(h, LEAKY_SLOPE * h)
        hpad_ref[d1:d1 + H, :] = h.astype(hpad_ref.dtype)   # h never leaves VMEM

        # ---- conv_block2: conv3x3(dilation d1) + BN2; + residual; LeakyReLU -
        acc = _dilated_conv3x3(hpad_ref, g2_ref, H, d1)
        y = acc * s2 + t2 + x                          # BN2 + residual add (f32)
        out_ref[i] = jnp.maximum(y, LEAKY_SLOPE * y).astype(out_ref.dtype)


def basic_block_forward(x_nchw, params, dilations, *, batch_block=1):
    """x_nchw: (N, C, H, W) f32 (PyTorch layout). Returns (N, C, H, W) f32."""
    N, C, H, W = x_nchw.shape
    d0, d1 = dilations
    WC = W * C
    nb = batch_block
    assert N % nb == 0, "batch_block must divide N"

    # Lane-dense internal layout: (N, H, W*C), lane index = w*C + c.
    x = jnp.transpose(x_nchw, (0, 2, 3, 1)).astype(jnp.float32).reshape(N, H, WC)

    def banded(w_hwio, d):
        # (3, 3, Cin, Cout) -> (3, W*Cin, W*Cout).  Band structure handles the
        # kx taps AND the conv's left/right zero padding (missing bands = 0).
        mats = []
        for ky in range(3):
            g = sum(jnp.kron(jnp.eye(W, k=-(kx - 1) * d, dtype=jnp.float32),
                             w_hwio[ky, kx]) for kx in range(3))
            mats.append(g)
        return jnp.stack(mats).astype(jnp.bfloat16)

    def fold_bn(conv, bn):
        # Fold conv bias into eval-mode BN; tile per-channel vectors to lanes.
        scale = bn["gamma"] / jnp.sqrt(bn["var"] + BN_EPS)
        shift = bn["beta"] - bn["mean"] * scale + conv["b"] * scale
        return jnp.tile(scale, W), jnp.tile(shift, W)

    g1 = banded(params["conv1"]["w"], d0)
    g2 = banded(params["conv2"]["w"], d1)
    s1, t1 = fold_bn(params["conv1"], params["bn1"])
    s2, t2 = fold_bn(params["conv2"], params["bn2"])
    ss = jnp.stack([s1, t1, s2, t2]).astype(jnp.float32)          # (4, W*C)

    kernel = functools.partial(_basic_block_kernel,
                               H=H, WC=WC, d0=d0, d1=d1, nb=nb)

    out = pl.pallas_call(
        kernel,
        out_shape=jax.ShapeDtypeStruct((N, H, WC), jnp.float32),
        grid=(N // nb,),
        in_specs=[
            pl.BlockSpec((nb, H, WC), lambda n: (n, 0, 0)),       # x (also residual)
            pl.BlockSpec((3, WC, WC), lambda n: (0, 0, 0)),       # banded conv1 weights (bf16)
            pl.BlockSpec((3, WC, WC), lambda n: (0, 0, 0)),       # banded conv2 weights (bf16)
            pl.BlockSpec((4, WC), lambda n: (0, 0)),              # scale1/shift1/scale2/shift2
        ],
        out_specs=pl.BlockSpec((nb, H, WC), lambda n: (n, 0, 0)),
        scratch_shapes=[
            pltpu.VMEM((H + 2 * d0, WC), jnp.bfloat16),           # row-padded x (bf16)
            pltpu.VMEM((H + 2 * d1, WC), jnp.bfloat16),           # row-padded h (bf16)
        ],
        compiler_params=pltpu.CompilerParams(
            dimension_semantics=("parallel",)),
    )(x, g1, g2, ss)

    return jnp.transpose(out.reshape(N, H, W, C), (0, 3, 1, 2))   # -> NCHW


# ----------------------------------------------------------------------------
# Parameter setup + pure-JAX reference (correctness check).
# ----------------------------------------------------------------------------
def init_basic_block_params(key, channel_num):
    C = channel_num
    ks = jax.random.split(key, 4)

    def conv(k):
        kw, kb = jax.random.split(k)
        # PyTorch layout (Cout, Cin, 3, 3) -> HWIO (3, 3, Cin, Cout)
        w = 0.05 * jax.random.normal(kw, (C, C, 3, 3), jnp.float32)
        w = jnp.transpose(w, (2, 3, 1, 0))
        b = 0.05 * jax.random.normal(kb, (C,), jnp.float32)
        return {"w": w, "b": b}

    def bn(k):
        k1, k2, k3, k4 = jax.random.split(k, 4)
        return {"gamma": 1.0 + 0.1 * jax.random.normal(k1, (C,), jnp.float32),
                "beta": 0.1 * jax.random.normal(k2, (C,), jnp.float32),
                "mean": 0.1 * jax.random.normal(k3, (C,), jnp.float32),
                "var": 1.0 + 0.1 * jax.random.uniform(k4, (C,), jnp.float32)}

    return {"conv1": conv(ks[0]), "bn1": bn(ks[1]),
            "conv2": conv(ks[2]), "bn2": bn(ks[3])}


def basic_block_reference(x_nchw, params, dilations):
    """Plain-JAX reference of BasicBlock.forward (eval-mode BN)."""
    x = jnp.transpose(x_nchw, (0, 2, 3, 1))
    d0, d1 = dilations

    def conv(h, p, d):
        y = jax.lax.conv_general_dilated(
            h, p["w"], window_strides=(1, 1), padding=((d, d), (d, d)),
            rhs_dilation=(d, d), dimension_numbers=("NHWC", "HWIO", "NHWC"))
        return y + p["b"]

    def bn(h, p):
        scale = p["gamma"] / jnp.sqrt(p["var"] + BN_EPS)
        return (h - p["mean"]) * scale + p["beta"]

    def lrelu(h):
        return jnp.where(h > 0, h, LEAKY_SLOPE * h)

    h = lrelu(bn(conv(x, params["conv1"], d0), params["bn1"]))
    y = bn(conv(h, params["conv2"], d1), params["bn2"])
    out = lrelu(y + x)
    return jnp.transpose(out, (0, 3, 1, 2))


if __name__ == "__main__":
    key = jax.random.PRNGKey(0)
    k_x, k_p = jax.random.split(key)

    # Small shapes consistent with the module (e.g. the dilation-2 BasicBlock
    # inside UpSampleBN, channel_num = output_features = 16).
    N, C, H, W = 2, 16, 16, 16
    dilations = (2, 2)

    x = jax.random.normal(k_x, (N, C, H, W), jnp.float32)
    params = init_basic_block_params(k_p, C)

    out = basic_block_forward(x, params, dilations, batch_block=1)
    out = jax.block_until_ready(out)
    assert out.shape == (N, C, H, W), out.shape

    ref = basic_block_reference(x, params, dilations)
    err = float(jnp.max(jnp.abs(out - ref)))
    assert err < 3e-2, f"max |err| = {err}"
    print("KERNEL_OK")
</pallas_src>

<mosaic_0001>
module attributes {stable_mosaic.version = 11 : i64} {
  func.func @_basic_block_kernel(%arg0: i32, %arg1: memref<1x16x256xf32, #tpu.memory_space<vmem>>, %arg2: memref<3x256x256xbf16, #tpu.memory_space<vmem>>, %arg3: memref<3x256x256xbf16, #tpu.memory_space<vmem>>, %arg4: memref<4x256xf32, #tpu.memory_space<vmem>>, %arg5: memref<1x16x256xf32, #tpu.memory_space<vmem>>, %arg6: memref<20x256xbf16, #tpu.memory_space<vmem>>, %arg7: memref<20x256xbf16, #tpu.memory_space<vmem>>) attributes {dimension_semantics = [#tpu.dimension_semantics<parallel>], iteration_bounds = array<i64: 2>, scalar_prefetch = 0 : i64, scratch_operands = 2 : i64, tpu.core_type = #tpu.core_type<tc>, window_params = [{transform_indices = @transform_0, window_bounds = array<i64: 1, 16, 256>}, {pipeline_mode = #tpu.pipeline_mode<synchronous>, transform_indices = @transform_1, window_bounds = array<i64: 3, 256, 256>}, {pipeline_mode = #tpu.pipeline_mode<synchronous>, transform_indices = @transform_2, window_bounds = array<i64: 3, 256, 256>}, {pipeline_mode = #tpu.pipeline_mode<synchronous>, transform_indices = @transform_3, window_bounds = array<i64: 4, 256>}, {transform_indices = @transform_4, window_bounds = array<i64: 1, 16, 256>}]} {
    %c0 = arith.constant 0 : index
    %c0_0 = arith.constant 0 : index
    %0 = vector.load %arg4[%c0, %c0_0] : memref<4x256xf32, #tpu.memory_space<vmem>>, vector<1x256xf32>
    %c1 = arith.constant 1 : index
    %c0_1 = arith.constant 0 : index
    %1 = vector.load %arg4[%c1, %c0_1] : memref<4x256xf32, #tpu.memory_space<vmem>>, vector<1x256xf32>
    %c2 = arith.constant 2 : index
    %c0_2 = arith.constant 0 : index
    %2 = vector.load %arg4[%c2, %c0_2] : memref<4x256xf32, #tpu.memory_space<vmem>>, vector<1x256xf32>
    %c3 = arith.constant 3 : index
    %c0_3 = arith.constant 0 : index
    %3 = vector.load %arg4[%c3, %c0_3] : memref<4x256xf32, #tpu.memory_space<vmem>>, vector<1x256xf32>
    %cst = arith.constant 0.000000e+00 : bf16
    %4 = vector.broadcast %cst : bf16 to vector<2x256xbf16>
    %c0_4 = arith.constant 0 : index
    %c0_5 = arith.constant 0 : index
    %5 = vector.load %arg6[%c0_4, %c0_5] : memref<20x256xbf16, #tpu.memory_space<vmem>>, vector<2x256xbf16>
    tpu.vector_store %arg6[%c0_4, %c0_5], %4 {strides = array<i32>} : memref<20x256xbf16, #tpu.memory_space<vmem>>, vector<2x256xbf16>,
    %cst_6 = arith.constant 0.000000e+00 : bf16
    %6 = vector.broadcast %cst_6 : bf16 to vector<2x256xbf16>
    %c18 = arith.constant 18 : index
    %c0_7 = arith.constant 0 : index
    %7 = vector.load %arg6[%c18, %c0_7] : memref<20x256xbf16, #tpu.memory_space<vmem>>, vector<2x256xbf16>
    tpu.vector_store %arg6[%c18, %c0_7], %6 {strides = array<i32>} : memref<20x256xbf16, #tpu.memory_space<vmem>>, vector<2x256xbf16>,
    %cst_8 = arith.constant 0.000000e+00 : bf16
    %8 = vector.broadcast %cst_8 : bf16 to vector<2x256xbf16>
    %c0_9 = arith.constant 0 : index
    %c0_10 = arith.constant 0 : index
    %9 = vector.load %arg7[%c0_9, %c0_10] : memref<20x256xbf16, #tpu.memory_space<vmem>>, vector<2x256xbf16>
    tpu.vector_store %arg7[%c0_9, %c0_10], %8 {strides = array<i32>} : memref<20x256xbf16, #tpu.memory_space<vmem>>, vector<2x256xbf16>,
    %cst_11 = arith.constant 0.000000e+00 : bf16
    %10 = vector.broadcast %cst_11 : bf16 to vector<2x256xbf16>
    %c18_12 = arith.constant 18 : index
    %c0_13 = arith.constant 0 : index
    %11 = vector.load %arg7[%c18_12, %c0_13] : memref<20x256xbf16, #tpu.memory_space<vmem>>, vector<2x256xbf16>
    tpu.vector_store %arg7[%c18_12, %c0_13], %10 {strides = array<i32>} : memref<20x256xbf16, #tpu.memory_space<vmem>>, vector<2x256xbf16>,
    %c0_14 = arith.constant 0 : index
    %c0_15 = arith.constant 0 : index
    %c0_16 = arith.constant 0 : index
    %12 = vector.load %arg1[%c0_14, %c0_15, %c0_16] : memref<1x16x256xf32, #tpu.memory_space<vmem>>, vector<1x16x256xf32>
    %13 = vector.shape_cast %12 : vector<1x16x256xf32> to vector<16x256xf32>
    %14 = arith.truncf %13 : vector<16x256xf32> to vector<16x256xbf16>
    %c2_17 = arith.constant 2 : index
    %c0_18 = arith.constant 0 : index
    %15 = vector.load %arg6[%c2_17, %c0_18] : memref<20x256xbf16, #tpu.memory_space<vmem>>, vector<16x256xbf16>
    tpu.vector_store %arg6[%c2_17, %c0_18], %14 {strides = array<i32>} : memref<20x256xbf16, #tpu.memory_space<vmem>>, vector<16x256xbf16>,
    %c0_19 = arith.constant 0 : index
    %c0_20 = arith.constant 0 : index
    %16 = vector.load %arg6[%c0_19, %c0_20] : memref<20x256xbf16, #tpu.memory_space<vmem>>, vector<16x256xbf16>
    %c0_21 = arith.constant 0 : index
    %c0_22 = arith.constant 0 : index
    %c0_23 = arith.constant 0 : index
    %17 = vector.load %arg2[%c0_21, %c0_22, %c0_23] : memref<3x256x256xbf16, #tpu.memory_space<vmem>>, vector<1x256x256xbf16>
    %18 = vector.shape_cast %17 : vector<1x256x256xbf16> to vector<256x256xbf16>
    %cst_24 = arith.constant dense<0.000000e+00> : vector<16x256xf32>
    %19 = tpu.matmul %16, %18, %cst_24 {dimension_numbers = #tpu.dot_dimension_numbers<[1], [0], [0], [1], [0, 0, 1, 1], [], []>} : vector<16x256xbf16>, vector<256x256xbf16>, vector<16x256xf32> -> vector<16x256xf32>
    %c2_25 = arith.constant 2 : index
    %c0_26 = arith.constant 0 : index
    %20 = vector.load %arg6[%c2_25, %c0_26] : memref<20x256xbf16, #tpu.memory_space<vmem>>, vector<16x256xbf16>
    %c1_27 = arith.constant 1 : index
    %c0_28 = arith.constant 0 : index
    %c0_29 = arith.constant 0 : index
    %21 = vector.load %arg2[%c1_27, %c0_28, %c0_29] : memref<3x256x256xbf16, #tpu.memory_space<vmem>>, vector<1x256x256xbf16>
    %22 = vector.shape_cast %21 : vector<1x256x256xbf16> to vector<256x256xbf16>
    %cst_30 = arith.constant dense<0.000000e+00> : vector<16x256xf32>
    %23 = tpu.matmul %20, %22, %cst_30 {dimension_numbers = #tpu.dot_dimension_numbers<[1], [0], [0], [1], [0, 0, 1, 1], [], []>} : vector<16x256xbf16>, vector<256x256xbf16>, vector<16x256xf32> -> vector<16x256xf32>
    %24 = arith.addf %19, %23 : vector<16x256xf32>
    %c4 = arith.constant 4 : index
    %c0_31 = arith.constant 0 : index
    %25 = vector.load %arg6[%c4, %c0_31] : memref<20x256xbf16, #tpu.memory_space<vmem>>, vector<16x256xbf16>
    %c2_32 = arith.constant 2 : index
    %c0_33 = arith.constant 0 : index
    %c0_34 = arith.constant 0 : index
    %26 = vector.load %arg2[%c2_32, %c0_33, %c0_34] : memref<3x256x256xbf16, #tpu.memory_space<vmem>>, vector<1x256x256xbf16>
    %27 = vector.shape_cast %26 : vector<1x256x256xbf16> to vector<256x256xbf16>
    %cst_35 = arith.constant dense<0.000000e+00> : vector<16x256xf32>
    %28 = tpu.matmul %25, %27, %cst_35 {dimension_numbers = #tpu.dot_dimension_numbers<[1], [0], [0], [1], [0, 0, 1, 1], [], []>} : vector<16x256xbf16>, vector<256x256xbf16>, vector<16x256xf32> -> vector<16x256xf32>
    %29 = arith.addf %24, %28 : vector<16x256xf32>
    %30 = vector.broadcast %0 : vector<1x256xf32> to vector<16x256xf32>
    %31 = arith.mulf %29, %30 : vector<16x256xf32>
    %32 = vector.broadcast %1 : vector<1x256xf32> to vector<16x256xf32>
    %33 = arith.addf %31, %32 : vector<16x256xf32>
    %cst_36 = arith.constant 0.00999999977 : f32
    %34 = vector.broadcast %cst_36 : f32 to vector<16x256xf32>
    %35 = arith.mulf %34, %33 : vector<16x256xf32>
    %36 = arith.maximumf %33, %35 : vector<16x256xf32>
    %37 = arith.truncf %36 : vector<16x256xf32> to vector<16x256xbf16>
    %c2_37 = arith.constant 2 : index
    %c0_38 = arith.constant 0 : index
    %38 = vector.load %arg7[%c2_37, %c0_38] : memref<20x256xbf16, #tpu.memory_space<vmem>>, vector<16x256xbf16>
    tpu.vector_store %arg7[%c2_37, %c0_38], %37 {strides = array<i32>} : memref<20x256xbf16, #tpu.memory_space<vmem>>, vector<16x256xbf16>,
    %c0_39 = arith.constant 0 : index
    %c0_40 = arith.constant 0 : index
    %39 = vector.load %arg7[%c0_39, %c0_40] : memref<20x256xbf16, #tpu.memory_space<vmem>>, vector<16x256xbf16>
    %c0_41 = arith.constant 0 : index
    %c0_42 = arith.constant 0 : index
    %c0_43 = arith.constant 0 : index
    %40 = vector.load %arg3[%c0_41, %c0_42, %c0_43] : memref<3x256x256xbf16, #tpu.memory_space<vmem>>, vector<1x256x256xbf16>
    %41 = vector.shape_cast %40 : vector<1x256x256xbf16> to vector<256x256xbf16>
    %cst_44 = arith.constant dense<0.000000e+00> : vector<16x256xf32>
    %42 = tpu.matmul %39, %41, %cst_44 {dimension_numbers = #tpu.dot_dimension_numbers<[1], [0], [0], [1], [0, 0, 1, 1], [], []>} : vector<16x256xbf16>, vector<256x256xbf16>, vector<16x256xf32> -> vector<16x256xf32>
    %c2_45 = arith.constant 2 : index
    %c0_46 = arith.constant 0 : index
    %43 = vector.load %arg7[%c2_45, %c0_46] : memref<20x256xbf16, #tpu.memory_space<vmem>>, vector<16x256xbf16>
    %c1_47 = arith.constant 1 : index
    %c0_48 = arith.constant 0 : index
    %c0_49 = arith.constant 0 : index
    %44 = vector.load %arg3[%c1_47, %c0_48, %c0_49] : memref<3x256x256xbf16, #tpu.memory_space<vmem>>, vector<1x256x256xbf16>
    %45 = vector.shape_cast %44 : vector<1x256x256xbf16> to vector<256x256xbf16>
    %cst_50 = arith.constant dense<0.000000e+00> : vector<16x256xf32>
    %46 = tpu.matmul %43, %45, %cst_50 {dimension_numbers = #tpu.dot_dimension_numbers<[1], [0], [0], [1], [0, 0, 1, 1], [], []>} : vector<16x256xbf16>, vector<256x256xbf16>, vector<16x256xf32> -> vector<16x256xf32>
    %47 = arith.addf %42, %46 : vector<16x256xf32>
    %c4_51 = arith.constant 4 : index
    %c0_52 = arith.constant 0 : index
    %48 = vector.load %arg7[%c4_51, %c0_52] : memref<20x256xbf16, #tpu.memory_space<vmem>>, vector<16x256xbf16>
    %c2_53 = arith.constant 2 : index
    %c0_54 = arith.constant 0 : index
    %c0_55 = arith.constant 0 : index
    %49 = vector.load %arg3[%c2_53, %c0_54, %c0_55] : memref<3x256x256xbf16, #tpu.memory_space<vmem>>, vector<1x256x256xbf16>
    %50 = vector.shape_cast %49 : vector<1x256x256xbf16> to vector<256x256xbf16>
    %cst_56 = arith.constant dense<0.000000e+00> : vector<16x256xf32>
    %51 = tpu.matmul %48, %50, %cst_56 {dimension_numbers = #tpu.dot_dimension_numbers<[1], [0], [0], [1], [0, 0, 1, 1], [], []>} : vector<16x256xbf16>, vector<256x256xbf16>, vector<16x256xf32> -> vector<16x256xf32>
    %52 = arith.addf %47, %51 : vector<16x256xf32>
    %53 = vector.broadcast %2 : vector<1x256xf32> to vector<16x256xf32>
    %54 = arith.mulf %52, %53 : vector<16x256xf32>
    %55 = vector.broadcast %3 : vector<1x256xf32> to vector<16x256xf32>
    %56 = arith.addf %54, %55 : vector<16x256xf32>
    %57 = arith.addf %56, %13 : vector<16x256xf32>
    %cst_57 = arith.constant 0.00999999977 : f32
    %58 = vector.broadcast %cst_57 : f32 to vector<16x256xf32>
    %59 = arith.mulf %58, %57 : vector<16x256xf32>
    %60 = arith.maximumf %57, %59 : vector<16x256xf32>
    %c0_58 = arith.constant 0 : index
    %c0_59 = arith.constant 0 : index
    %c0_60 = arith.constant 0 : index
    %61 = vector.load %arg5[%c0_58, %c0_59, %c0_60] : memref<1x16x256xf32, #tpu.memory_space<vmem>>, vector<1x16x256xf32>
    %62 = vector.shape_cast %61 : vector<1x16x256xf32> to vector<16x256xf32>
    %63 = vector.shape_cast %60 : vector<16x256xf32> to vector<1x16x256xf32>
    tpu.vector_store %arg5[%c0_58, %c0_59, %c0_60], %63 {strides = array<i32>} : memref<1x16x256xf32, #tpu.memory_space<vmem>>, vector<1x16x256xf32>,
    return
  }
  func.func @transform_0(%arg0: i32) -> (i32, i32, i32) {
    %c0_i32 = arith.constant 0 : i32
    %c0_i32_0 = arith.constant 0 : i32
    %c0_i32_1 = arith.constant 0 : i32
    return %arg0, %c0_i32, %c0_i32_0 : i32, i32, i32
  }
  func.func @transform_1(%arg0: i32) -> (i32, i32, i32) {
    %c0_i32 = arith.constant 0 : i32
    %c0_i32_0 = arith.constant 0 : i32
    %c0_i32_1 = arith.constant 0 : i32
    %c0_i32_2 = arith.constant 0 : i32
    return %c0_i32, %c0_i32_0, %c0_i32_1 : i32, i32, i32
  }
  func.func @transform_2(%arg0: i32) -> (i32, i32, i32) {
    %c0_i32 = arith.constant 0 : i32
    %c0_i32_0 = arith.constant 0 : i32
    %c0_i32_1 = arith.constant 0 : i32
    %c0_i32_2 = arith.constant 0 : i32
    return %c0_i32, %c0_i32_0, %c0_i32_1 : i32, i32, i32
  }
  func.func @transform_3(%arg0: i32) -> (i32, i32) {
    %c0_i32 = arith.constant 0 : i32
    %c0_i32_0 = arith.constant 0 : i32
    %c0_i32_1 = arith.constant 0 : i32
    return %c0_i32, %c0_i32_0 : i32, i32
  }
  func.func @transform_4(%arg0: i32) -> (i32, i32, i32) {
    %c0_i32 = arith.constant 0 : i32
    %c0_i32_0 = arith.constant 0 : i32
    %c0_i32_1 = arith.constant 0 : i32
    return %arg0, %c0_i32, %c0_i32_0 : i32, i32, i32
  }
}

</mosaic_0001>

<llo_original>
// kernel: tpu_custom_call.1
$region0: #{tpu_custom_call.1}
  #allocation0 [shape = 'u32[]', space=smem, size = 0x4, offset = 0x4, fixed_abs, tag = 'smem constant byte address 0x4 - core index']
  #allocation1 [shape = 'u32[144,128]{1,0:T(1,128)}', space=vmem, size = 0x12000, scoped, tag = 'internal scratch']
  #allocation2 [shape = 'bf16[20,256]{1,0:T(8,128)(2,1)}', space=vmem, size = 0x3000, scoped, tag = 'scratch operand']
  #allocation3 [shape = 'bf16[20,256]{1,0:T(8,128)(2,1)}', space=vmem, size = 0x3000, scoped, tag = 'scratch operand']
  %s0 = inlined_call_operand.hbm [shape: f32[2,16,256], index: 0, kind: input, shape index: {}]
  %s1 = inlined_call_operand.hbm [shape: bf16[3,256,256], index: 1, kind: input, shape index: {}]
  %s2 = inlined_call_operand.hbm [shape: bf16[3,256,256], index: 2, kind: input, shape index: {}]
  %s3 = inlined_call_operand.vmem [shape: f32[4,256], index: 3, kind: input, shape index: {}]
  %s4 = inlined_call_operand.hbm [shape: f32[2,16,256], index: 4, kind: output, shape index: {}]
  %s5 = sld [smem:[#allocation0]]
  $region61: #{tpu_custom_call.1} parent=0
    _
  %s7 = ssub.s32 1, %s5
  %s8 = scalar_select 0, %s7, %s5
  $region1: #{tpu_custom_call.1} parent=0
    #allocation4 [shape = 'u8[32768]{0}', space=vmem, size = 0x8000, scoped, tag = 'input window, operand 0']
    #allocation5 [shape = 's32[2]{0}', space=sflag, size = 0x8, scoped, tag = 'scoped memory for tpu_custom_call.1']
    #allocation6 [shape = 's32[2]{0}', space=sflag, size = 0x8, scoped, tag = 'scoped memory for tpu_custom_call.1']
    #allocation7 [shape = 'u8[393216]{0}', space=vmem, size = 0x60000, scoped, tag = 'input window, operand 1, single buffered']
    #allocation8 [shape = 's32[1]{0}', space=sflag, size = 0x4, scoped, tag = 'scoped memory for tpu_custom_call.1']
    #allocation9 [shape = 'u8[393216]{0}', space=vmem, size = 0x60000, scoped, tag = 'input window, operand 2, single buffered']
    #allocation10 [shape = 'u8[32768]{0}', space=vmem, size = 0x8000, scoped, tag = 'output window, operand 0']
    %9 = vsyncpa [#allocation5], 0
    %s10 = scalar_lea.sflag [#allocation5], 1
    %11 = vsyncpa %s10, 0
    %12 = vsyncpa [#allocation8], 0
    %13 = vsyncpa [#allocation6], 0
    %s14 = scalar_lea.sflag [#allocation6], 1
    %15 = vsyncpa %s14, 0
    loop: start=0, step=1, limit=4
    $region2: #{tpu_custom_call.1} parent=1 // loop_pre_header
      _
    $region3: #{tpu_custom_call.1} parent=1 // loop_header
      %s17 = sphi 0, %s21
      %p18 = scmp.ge.s32.totalorder %s17, 4
      %s27 = sphi 0, %s29
      %s30 = sphi 0, %s27
      %s31 = sphi 0, %s30
      %s47 = sphi 0, %s31
      %s51 = sphi 0, %s51
      %s53 = sphi 0, %s51
      %s54 = sphi 0, %s53
      %s68 = sphi 0, %s54
      %s72 = sphi 0, %s72
      %s74 = sphi 0, %s72
      %s75 = sphi 0, %s74
      %s89 = sphi 0, %s75
      %s93 = sphi 0, %s93
      %s95 = sphi 0, %s93
      %s96 = sphi 0, %s95
      %s110 = sphi 0, %s96
      %s116 = sphi 0, %s118
      %s119 = sphi 0, %s116
      %s120 = sphi 0, %s119
      %s136 = sphi 0, %s120
    $region4: #{tpu_custom_call.1} parent=1 // loop_header_branch
      %20 = sbr.rel (%p18) target = $region8
    $region5: #{tpu_custom_call.1} parent=1 // loop_body
      %s22 = ssub.s32 %s17, 1
      %s23 = ssub.s32 %s17, 2
      %s24 = sadd.s32 %s17, 1
      %s25 = ssub.s32 %s17, %s24
      %p26 = scmp.eq.s32.totalorder %s25, 0
      %s28 = sadd.s32 %s27, 1
      %s29 = scalar_select %p26, %s27, %s28
      %p32 = pneg %p26
      %p33 = scmp.eq.s32.totalorder %s17, 1
      %p34 = por %p32, %p33
      %p35 = scmp.ne.s32.totalorder %s27, %s30
      %p36 = scmp.eq.s32.totalorder %s17, 0
      %p37 = por %p35, %p36
      %p38 = scmp.ne.s32.totalorder %s27, %s30
      %p39 = scmp.eq.s32.totalorder %s22, 1
      %p40 = por %p38, %p39
      %p41 = scmp.ne.s32.totalorder %s30, %s31
      %p42 = scmp.eq.s32.totalorder %s22, 0
      %p43 = por %p41, %p42
      %p44 = scmp.ne.s32.totalorder %s30, %s31
      %p45 = scmp.eq.s32.totalorder %s23, 1
      %p46 = por %p44, %p45
      %p48 = scmp.ne.s32.totalorder %s31, %s47
      %p49 = scmp.eq.s32.totalorder %s23, 0
      %p50 = por %p48, %p49
      %s52 = sadd.s32 %s51, 1
      %p55 = scmp.eq.s32.totalorder %s17, 1
      %p56 = scmp.ne.s32.totalorder %s51, %s53
      %p57 = scmp.eq.s32.totalorder %s17, 0
      %p58 = por %p56, %p57
      %p59 = scmp.ne.s32.totalorder %s51, %s53
      %p60 = scmp.eq.s32.totalorder %s22, 1
      %p61 = por %p59, %p60
      %p62 = scmp.ne.s32.totalorder %s53, %s54
      %p63 = scmp.eq.s32.totalorder %s22, 0
      %p64 = por %p62, %p63
      %p65 = scmp.ne.s32.totalorder %s53, %s54
      %p66 = scmp.eq.s32.totalorder %s23, 1
      %p67 = por %p65, %p66
      %p69 = scmp.ne.s32.totalorder %s54, %s68
      %p70 = scmp.eq.s32.totalorder %s23, 0
      %p71 = por %p69, %p70
      %s73 = sadd.s32 %s72, 1
      %p76 = scmp.eq.s32.totalorder %s17, 1
      %p77 = scmp.ne.s32.totalorder %s72, %s74
      %p78 = scmp.eq.s32.totalorder %s17, 0
      %p79 = por %p77, %p78
      %p80 = scmp.ne.s32.totalorder %s72, %s74
      %p81 = scmp.eq.s32.totalorder %s22, 1
      %p82 = por %p80, %p81
      %p83 = scmp.ne.s32.totalorder %s74, %s75
      %p84 = scmp.eq.s32.totalorder %s22, 0
      %p85 = por %p83, %p84
      %p86 = scmp.ne.s32.totalorder %s74, %s75
      %p87 = scmp.eq.s32.totalorder %s23, 1
      %p88 = por %p86, %p87
      %p90 = scmp.ne.s32.totalorder %s75, %s89
      %p91 = scmp.eq.s32.totalorder %s23, 0
      %p92 = por %p90, %p91
      %s94 = sadd.s32 %s93, 1
      %p97 = scmp.eq.s32.totalorder %s17, 1
      %p98 = scmp.ne.s32.totalorder %s93, %s95
      %p99 = scmp.eq.s32.totalorder %s17, 0
      %p100 = por %p98, %p99
      %p101 = scmp.ne.s32.totalorder %s93, %s95
      %p102 = scmp.eq.s32.totalorder %s22, 1
      %p103 = por %p101, %p102
      %p104 = scmp.ne.s32.totalorder %s95, %s96
      %p105 = scmp.eq.s32.totalorder %s22, 0
      %p106 = por %p104, %p105
      %p107 = scmp.ne.s32.totalorder %s95, %s96
      %p108 = scmp.eq.s32.totalorder %s23, 1
      %p109 = por %p107, %p108
      %p111 = scmp.ne.s32.totalorder %s96, %s110
      %p112 = scmp.eq.s32.totalorder %s23, 0
      %p113 = por %p111, %p112
      %s114 = ssub.s32 %s17, %s24
      %p115 = scmp.eq.s32.totalorder %s114, 0
      %s117 = sadd.s32 %s116, 1
      %s118 = scalar_select %p115, %s116, %s117
      %p121 = pneg %p115
      %p122 = scmp.eq.s32.totalorder %s17, 1
      %p123 = por %p121, %p122
      %p124 = scmp.ne.s32.totalorder %s116, %s119
      %p125 = scmp.eq.s32.totalorder %s17, 0
      %p126 = por %p124, %p125
      %p127 = scmp.ne.s32.totalorder %s116, %s119
      %p128 = scmp.eq.s32.totalorder %s22, 1
      %p129 = por %p127, %p128
      %p130 = scmp.ne.s32.totalorder %s119, %s120
      %p131 = scmp.eq.s32.totalorder %s22, 0
      %p132 = por %p130, %p131
      %p133 = scmp.ne.s32.totalorder %s119, %s120
      %p134 = scmp.eq.s32.totalorder %s23, 1
      %p135 = por %p133, %p134
      %p137 = scmp.ne.s32.totalorder %s120, %s136
      %p138 = scmp.eq.s32.totalorder %s23, 0
      %p139 = por %p137, %p138
      %p140 = scmp.le.s32.totalorder 1, %s17
      %p141 = scmp.lt.s32.totalorder %s17, 3
      %p142 = pnand %p140, %p141
      %p143 = pneg %p142
      // Predicated region
      $region9: #{tpu_custom_call.1} parent=5 // pred_check
        _
      $region10: #{tpu_custom_call.1} parent=5 // pred_check_branch
        %145 = sbr.rel (%p142) target = $region12
      $region11: #{tpu_custom_call.1} parent=5 // pred_region
        %s146 = ssub.s32 %s17, 1
        // Predicated region
        $region13: #{tpu_custom_call.1} parent=11 // pred_check
          %p147 = pneg %p64
        $region14: #{tpu_custom_call.1} parent=11 // pred_check_branch
          %149 = sbr.rel (%p147) target = $region16
        $region15: #{tpu_custom_call.1} parent=11 // pred_region
          %s151 = ssub.s32 12288, 12288
          %152 = vsyncadd [#allocation8], %s151
          %s153 = sshll.u32 [#allocation7], 4
          %s154 = int_to_ptr.vmem [resolvable:$true] %s153
          %159 = dma.hbm_to_vmem [thread:$0]  %s1, 12288, %s154, [#allocation8], 128, 128, 8
        $region16: #{tpu_custom_call.1} parent=11 // pred_fallthru
          _
        // Predicated region
        $region17: #{tpu_custom_call.1} parent=11 // pred_check
          %p160 = pneg %p85
        $region18: #{tpu_custom_call.1} parent=11 // pred_check_branch
          %162 = sbr.rel (%p160) target = $region20
        $region19: #{tpu_custom_call.1} parent=11 // pred_region
          %s164 = ssub.s32 12288, 12288
          %165 = vsyncadd [#allocation8], %s164
          %s166 = sshll.u32 [#allocation9], 4
          %s167 = int_to_ptr.vmem [resolvable:$true] %s166
          %172 = dma.hbm_to_vmem [thread:$0]  %s2, 12288, %s167, [#allocation8], 128, 128, 8
        $region20: #{tpu_custom_call.1} parent=11 // pred_fallthru
          _
        // Predicated region
        $region21: #{tpu_custom_call.1} parent=11 // pred_check
          %p173 = pneg %p106
        $region22: #{tpu_custom_call.1} parent=11 // pred_check_branch
          %175 = sbr.rel (%p173) target = $region24
        $region23: #{tpu_custom_call.1} parent=11 // pred_region
          _
        $region24: #{tpu_custom_call.1} parent=11 // pred_fallthru
          _
      $region12: #{tpu_custom_call.1} parent=5 // pred_fallthru
        _
      %p176 = scmp.lt.s32.totalorder %s17, 2
      // Predicated region
      $region25: #{tpu_custom_call.1} parent=5 // pred_check
        %p177 = pneg %p176
      $region26: #{tpu_custom_call.1} parent=5 // pred_check_branch
        %179 = sbr.rel (%p177) target = $region28
      $region27: #{tpu_custom_call.1} parent=5 // pred_region
        // Predicated region
        $region29: #{tpu_custom_call.1} parent=27 // pred_check
          %p180 = pneg %p37
        $region30: #{tpu_custom_call.1} parent=27 // pred_check_branch
          %182 = sbr.rel (%p180) target = $region32
        $region31: #{tpu_custom_call.1} parent=27 // pred_region
          %s183 = sand.u32 %s27, 1
          %s184 = scalar_lea.sflag [#allocation5], %s183
          %s185 = sand.u32 %s27, 1
          %s186 = smul.addr %s185, 32
          %s187 = scalar_lea.vmem [#allocation4], %s186
          %s189 = ssub.s32 512, 512
          %190 = vsyncadd %s184, %s189
          %s191 = smul.addr %s17, 4
          %s192 = smul.addr %s191, 128
          %s193 = scalar_lea.hbm %s0, %s192
          %s194 = sshll.u32 %s187, 4
          %s195 = int_to_ptr.vmem [resolvable:$true] %s194
          %200 = dma.hbm_to_vmem [thread:$0]  %s193, 512, %s195, %s184, 256, 256, 16
        $region32: #{tpu_custom_call.1} parent=27 // pred_fallthru
          _
      $region28: #{tpu_custom_call.1} parent=5 // pred_fallthru
        _
      %p201 = scmp.le.s32.totalorder 1, %s17
      %p202 = scmp.lt.s32.totalorder %s17, 3
      %p203 = pnand %p201, %p202
      %p204 = pneg %p203
      // Predicated region
      $region33: #{tpu_custom_call.1} parent=5 // pred_check
        _
      $region34: #{tpu_custom_call.1} parent=5 // pred_check_branch
        %206 = sbr.rel (%p203) target = $region36
      $region35: #{tpu_custom_call.1} parent=5 // pred_region
        %s207 = ssub.s32 %s17, 1
        %s208 = sand.u32 %s30, 1
        %s209 = scalar_lea.sflag [#allocation5], %s208
        %s210 = sand.u32 %s30, 1
        %s211 = smul.addr %s210, 32
        %s212 = scalar_lea.vmem [#allocation4], %s211
        // Predicated region
        $region37: #{tpu_custom_call.1} parent=35 // pred_check
          %p213 = pneg %p43
        $region38: #{tpu_custom_call.1} parent=35 // pred_check_branch
          %215 = sbr.rel (%p213) target = $region40
        $region39: #{tpu_custom_call.1} parent=35 // pred_region
          %216 = dma.done %s209, 512
        $region40: #{tpu_custom_call.1} parent=35 // pred_fallthru
          _
        // Predicated region
        $region41: #{tpu_custom_call.1} parent=35 // pred_check
          %p217 = pneg %p64
        $region42: #{tpu_custom_call.1} parent=35 // pred_check_branch
          %219 = sbr.rel (%p217) target = $region44
        $region43: #{tpu_custom_call.1} parent=35 // pred_region
          %220 = dma.done [#allocation8], 12288
        $region44: #{tpu_custom_call.1} parent=35 // pred_fallthru
          _
        // Predicated region
        $region45: #{tpu_custom_call.1} parent=35 // pred_check
          %p221 = pneg %p85
        $region46: #{tpu_custom_call.1} parent=35 // pred_check_branch
          %223 = sbr.rel (%p221) target = $region48
        $region47: #{tpu_custom_call.1} parent=35 // pred_region
          %224 = dma.done [#allocation8], 12288
        $region48: #{tpu_custom_call.1} parent=35 // pred_fallthru
          _
        %s225 = sand.u32 %s30, 1
        %s226 = scalar_lea.sflag [#allocation5], %s225
        %s227 = sand.u32 %s30, 1
        %s228 = smul.addr %s227, 32
        %s229 = scalar_lea.vmem [#allocation4], %s228
        %p230 = pneg %p43
        %p231 = pneg %p40
        %p232 = pneg %p64
        %p233 = pneg %p61
        %p234 = pneg %p85
        %p235 = pneg %p82
        %p236 = pneg %p106
        %p237 = pneg %p103
        %p238 = pneg %p132
        %p239 = pneg %p129
        %s240 = sand.u32 %s119, 1
        %s241 = scalar_lea.sflag [#allocation6], %s240
        %s242 = sand.u32 %s119, 1
        %s243 = smul.addr %s242, 32
        %s244 = scalar_lea.vmem [#allocation10], %s243
        %v246 = vld [vmem:[%s3] ss:$4 sm:$0x3]
        %s247 = scalar_lea.vmem %s3, 1
        %v248 = vld [vmem:[%s247] ss:$4 sm:$0x3]
        %s249 = scalar_lea.vmem %s3, 2
        %v250 = vld [vmem:[%s249] ss:$4 sm:$0x3]
        %s251 = scalar_lea.vmem %s3, 3
        %v252 = vld [vmem:[%s251] ss:$4 sm:$0x3]
        %253 = vst [vmem:[#allocation2] sm:$0x11] 0
        %254 = vst [vmem:[#allocation2 + $0x10] sm:$0x22] 0
        %255 = vst [vmem:[#allocation3] sm:$0x11] 0
        %256 = vst [vmem:[#allocation3 + $0x10] sm:$0x22] 0
        %v257 = vld [vmem:[%s212] sm:$0xff]
        %v258 = vld [vmem:[%s212 + $0x8] sm:$0xff]
        %v259 = vld [vmem:[%s212 + $0x10] sm:$0xff]
        %v260 = vld [vmem:[%s212 + $0x18] sm:$0xff]
        %v261 = vpack.c.bf16 %v259, %v257
        %v262 = vpack.c.bf16 %v260, %v258
        %v265 = vunpack.c.l.b16 %v261
        %v266 = vunpack.c.l.b16 %v262
        %v267 = vunpack.c.h.b16 %v261
        %v268 = vunpack.c.h.b16 %v262
        %v269 = vpack.c.b16 %v266, %v265
        %v270 = vpack.c.b16 %v268, %v267
        %vm271 = vcmask 1040384
        %vm272 = vcmask 1044484
        %vm273 = vmor %vm271, %vm272
        %v274 = vrot.slane %v269, 7
        %v275 = vrot.slane %v274, 4
        %v276 = vrot.slane %v270, 7
        %v277 = vsel %vm273, %v275, %v276
        %v278 = vrot.slane %v276, 4
        %282 = vst [vmem:[#allocation2] sm:$0xee] %v274
        %283 = vst [vmem:[#allocation2 + $0x8] sm:$0xff] %v277
        %284 = vst [vmem:[#allocation2 + $0x10] sm:$0x11] %v278
        %v285 = vld [vmem:[#allocation2] sm:$0xff]
        %v286 = vld [vmem:[#allocation2 + $0x8] sm:$0xff]
        %v287 = vld [vmem:[#allocation7] sm:$0xff]
        %v288 = vld [vmem:[#allocation7 + $0x8] sm:$0xff]
        %v289 = vld [vmem:[#allocation7 + $0x10] sm:$0xff]
        %v290 = vld [vmem:[#allocation7 + $0x18] sm:$0xff]
        %v291 = vld [vmem:[#allocation7 + $0x20] sm:$0xff]
        %v292 = vld [vmem:[#allocation7 + $0x28] sm:$0xff]
        %v293 = vld [vmem:[#allocation7 + $0x30] sm:$0xff]
        %v294 = vld [vmem:[#allocation7 + $0x38] sm:$0xff]
        %v295 = vld [vmem:[#allocation7 + $0x40] sm:$0xff]
        %v296 = vld [vmem:[#allocation7 + $0x48] sm:$0xff]
        %v297 = vld [vmem:[#allocation7 + $0x50] sm:$0xff]
        %v298 = vld [vmem:[#allocation7 + $0x58] sm:$0xff]
        %v299 = vld [vmem:[#allocation7 + $0x60] sm:$0xff]
        %v300 = vld [vmem:[#allocation7 + $0x68] sm:$0xff]
        %v301 = vld [vmem:[#allocation7 + $0x70] sm:$0xff]
        %v302 = vld [vmem:[#allocation7 + $0x78] sm:$0xff]
        %v303 = vld [vmem:[#allocation7 + $0x80] sm:$0xff]
        %v304 = vld [vmem:[#allocation7 + $0x88] sm:$0xff]
        %v305 = vld [vmem:[#allocation7 + $0x90] sm:$0xff]
        %v306 = vld [vmem:[#allocation7 + $0x98] sm:$0xff]
        %v307 = vld [vmem:[#allocation7 + $0xa0] sm:$0xff]
        %v308 = vld [vmem:[#allocation7 + $0xa8] sm:$0xff]
        %v309 = vld [vmem:[#allocation7 + $0xb0] sm:$0xff]
        %v310 = vld [vmem:[#allocation7 + $0xb8] sm:$0xff]
        %v311 = vld [vmem:[#allocation7 + $0xc0] sm:$0xff]
        %v312 = vld [vmem:[#allocation7 + $0xc8] sm:$0xff]
        %v313 = vld [vmem:[#allocation7 + $0xd0] sm:$0xff]
        %v314 = vld [vmem:[#allocation7 + $0xd8] sm:$0xff]
        %v315 = vld [vmem:[#allocation7 + $0xe0] sm:$0xff]
        %v316 = vld [vmem:[#allocation7 + $0xe8] sm:$0xff]
        %v317 = vld [vmem:[#allocation7 + $0xf0] sm:$0xff]
        %v318 = vld [vmem:[#allocation7 + $0xf8] sm:$0xff]
        %v319 = vld [vmem:[#allocation2] sm:$0xee]
        %v320 = vld [vmem:[#allocation2 + $0x10] sm:$0x11]
        %s321 = scalar_lea.vmem [#allocation7], 256
        %v322 = vld [vmem:[%s321] sm:$0xff]
        %v323 = vld [vmem:[%s321 + $0x8] sm:$0xff]
        %v324 = vld [vmem:[%s321 + $0x10] sm:$0xff]
        %v325 = vld [vmem:[%s321 + $0x18] sm:$0xff]
        %v326 = vld [vmem:[%s321 + $0x20] sm:$0xff]
        %v327 = vld [vmem:[%s321 + $0x28] sm:$0xff]
        %v328 = vld [vmem:[%s321 + $0x30] sm:$0xff]
        %v329 = vld [vmem:[%s321 + $0x38] sm:$0xff]
        %v330 = vld [vmem:[%s321 + $0x40] sm:$0xff]
        %v331 = vld [vmem:[%s321 + $0x48] sm:$0xff]
        %v332 = vld [vmem:[%s321 + $0x50] sm:$0xff]
        %v333 = vld [vmem:[%s321 + $0x58] sm:$0xff]
        %v334 = vld [vmem:[%s321 + $0x60] sm:$0xff]
        %v335 = vld [vmem:[%s321 + $0x68] sm:$0xff]
        %v336 = vld [vmem:[%s321 + $0x70] sm:$0xff]
        %v337 = vld [vmem:[%s321 + $0x78] sm:$0xff]
        %v338 = vld [vmem:[%s321 + $0x80] sm:$0xff]
        %v339 = vld [vmem:[%s321 + $0x88] sm:$0xff]
        %v340 = vld [vmem:[%s321 + $0x90] sm:$0xff]
        %v341 = vld [vmem:[%s321 + $0x98] sm:$0xff]
        %v342 = vld [vmem:[%s321 + $0xa0] sm:$0xff]
        %v343 = vld [vmem:[%s321 + $0xa8] sm:$0xff]
        %v344 = vld [vmem:[%s321 + $0xb0] sm:$0xff]
        %v345 = vld [vmem:[%s321 + $0xb8] sm:$0xff]
        %v346 = vld [vmem:[%s321 + $0xc0] sm:$0xff]
        %v347 = vld [vmem:[%s321 + $0xc8] sm:$0xff]
        %v348 = vld [vmem:[%s321 + $0xd0] sm:$0xff]
        %v349 = vld [vmem:[%s321 + $0xd8] sm:$0xff]
        %v350 = vld [vmem:[%s321 + $0xe0] sm:$0xff]
        %v351 = vld [vmem:[%s321 + $0xe8] sm:$0xff]
        %v352 = vld [vmem:[%s321 + $0xf0] sm:$0xff]
        %v353 = vld [vmem:[%s321 + $0xf8] sm:$0xff]
        %v357 = vunpack.c.l.b16 %v319
        %v358 = vunpack.c.h.b16 %v319
        %v359 = vunpack.c.l.b16 %v286
        %v360 = vunpack.c.h.b16 %v286
        %v361 = vunpack.c.l.b16 %v320
        %v362 = vunpack.c.h.b16 %v320
        %v363 = vpack.c.b16 %v359, %v357
        %v364 = vpack.c.b16 %v360, %v358
        %v365 = vpack.c.b16 %v361, %v361
        %v366 = vpack.c.b16 %v362, %v362
        %vm367 = vcmask 1046528
        %v368 = vrot.slane %v363, 1
        %v369 = vrot.slane %v365, 1
        %v370 = vsel %vm367, %v368, %v369
        %v371 = vrot.slane %v364, 1
        %v372 = vrot.slane %v366, 1
        %v373 = vsel %vm367, %v371, %v372
        %v408 = vunpack.c.l.b16 %v322
        %v409 = vunpack.c.h.b16 %v322
        %v410 = vunpack.c.l.b16 %v323
        %v411 = vunpack.c.h.b16 %v323
        %v412 = vunpack.c.l.b16 %v324
        %v413 = vunpack.c.h.b16 %v324
        %v414 = vunpack.c.l.b16 %v325
        %v415 = vunpack.c.h.b16 %v325
        %v416 = vunpack.c.l.b16 %v326
        %v417 = vunpack.c.h.b16 %v326
        %v418 = vunpack.c.l.b16 %v327
        %v419 = vunpack.c.h.b16 %v327
        %v420 = vunpack.c.l.b16 %v328
        %v421 = vunpack.c.h.b16 %v328
        %v422 = vunpack.c.l.b16 %v329
        %v423 = vunpack.c.h.b16 %v329
        %v424 = vunpack.c.l.b16 %v330
        %v425 = vunpack.c.h.b16 %v330
        %v426 = vunpack.c.l.b16 %v331
        %v427 = vunpack.c.h.b16 %v331
        %v428 = vunpack.c.l.b16 %v332
        %v429 = vunpack.c.h.b16 %v332
        %v430 = vunpack.c.l.b16 %v333
        %v431 = vunpack.c.h.b16 %v333
        %v432 = vunpack.c.l.b16 %v334
        %v433 = vunpack.c.h.b16 %v334
        %v434 = vunpack.c.l.b16 %v335
        %v435 = vunpack.c.h.b16 %v335
        %v436 = vunpack.c.l.b16 %v336
        %v437 = vunpack.c.h.b16 %v336
        %v438 = vunpack.c.l.b16 %v337
        %v439 = vunpack.c.h.b16 %v337
        %v440 = vunpack.c.l.b16 %v338
        %v441 = vunpack.c.h.b16 %v338
        %v442 = vunpack.c.l.b16 %v339
        %v443 = vunpack.c.h.b16 %v339
        %v444 = vunpack.c.l.b16 %v340
        %v445 = vunpack.c.h.b16 %v340
        %v446 = vunpack.c.l.b16 %v341
        %v447 = vunpack.c.h.b16 %v341
        %v448 = vunpack.c.l.b16 %v342
        %v449 = vunpack.c.h.b16 %v342
        %v450 = vunpack.c.l.b16 %v343
        %v451 = vunpack.c.h.b16 %v343
        %v452 = vunpack.c.l.b16 %v344
        %v453 = vunpack.c.h.b16 %v344
        %v454 = vunpack.c.l.b16 %v345
        %v455 = vunpack.c.h.b16 %v345
        %v456 = vunpack.c.l.b16 %v346
        %v457 = vunpack.c.h.b16 %v346
        %v458 = vunpack.c.l.b16 %v347
        %v459 = vunpack.c.h.b16 %v347
        %v460 = vunpack.c.l.b16 %v348
        %v461 = vunpack.c.h.b16 %v348
        %v462 = vunpack.c.l.b16 %v349
        %v463 = vunpack.c.h.b16 %v349
        %v464 = vunpack.c.l.b16 %v350
        %v465 = vunpack.c.h.b16 %v350
        %v466 = vunpack.c.l.b16 %v351
        %v467 = vunpack.c.h.b16 %v351
        %v468 = vunpack.c.l.b16 %v352
        %v469 = vunpack.c.h.b16 %v352
        %v470 = vunpack.c.l.b16 %v353
        %v471 = vunpack.c.h.b16 %v353
        %v472 = vpack.c.b16 %v410, %v408
        %v473 = vpack.c.b16 %v411, %v409
        %v474 = vpack.c.b16 %v414, %v412
        %v475 = vpack.c.b16 %v415, %v413
        %v476 = vpack.c.b16 %v418, %v416
        %v477 = vpack.c.b16 %v419, %v417
        %v478 = vpack.c.b16 %v422, %v420
        %v479 = vpack.c.b16 %v423, %v421
        %v480 = vpack.c.b16 %v426, %v424
        %v481 = vpack.c.b16 %v427, %v425
        %v482 = vpack.c.b16 %v430, %v428
        %v483 = vpack.c.b16 %v431, %v429
        %v484 = vpack.c.b16 %v434, %v432
        %v485 = vpack.c.b16 %v435, %v433
        %v486 = vpack.c.b16 %v438, %v436
        %v487 = vpack.c.b16 %v439, %v437
        %v488 = vpack.c.b16 %v442, %v440
        %v489 = vpack.c.b16 %v443, %v441
        %v490 = vpack.c.b16 %v446, %v444
        %v491 = vpack.c.b16 %v447, %v445
        %v492 = vpack.c.b16 %v450, %v448
        %v493 = vpack.c.b16 %v451, %v449
        %v494 = vpack.c.b16 %v454, %v452
        %v495 = vpack.c.b16 %v455, %v453
        %v496 = vpack.c.b16 %v458, %v456
        %v497 = vpack.c.b16 %v459, %v457
        %v498 = vpack.c.b16 %v462, %v460
        %v499 = vpack.c.b16 %v463, %v461
        %v500 = vpack.c.b16 %v466, %v464
        %v501 = vpack.c.b16 %v467, %v465
        %v502 = vpack.c.b16 %v470, %v468
        %v503 = vpack.c.b16 %v471, %v469
        %536 = vmatprep.subr.bf16.mxu0 %v473
        %537 = vmatpush1.bf16.msra.mxu0 %v472
        %538 = vmatprep.subr.bf16.mxu0 %v475
        %539 = vmatpush1.bf16.msra.mxu0 %v474
        %540 = vmatprep.subr.bf16.mxu0 %v477
        %541 = vmatpush1.bf16.msra.mxu0 %v476
        %542 = vmatprep.subr.bf16.mxu0 %v479
        %543 = vmatpush1.bf16.msra.mxu0 %v478
        %544 = vmatprep.subr.bf16.mxu0 %v481
        %545 = vmatpush1.bf16.msra.mxu0 %v480
        %546 = vmatprep.subr.bf16.mxu0 %v483
        %547 = vmatpush1.bf16.msra.mxu0 %v482
        %548 = vmatprep.subr.bf16.mxu0 %v485
        %549 = vmatpush1.bf16.msra.mxu0 %v484
        %550 = vmatprep.subr.bf16.mxu0 %v487
        %551 = vmatpush1.bf16.msra.mxu0 %v486
        %552 = vmatprep.subr.bf16.mxu0 %v489
        %553 = vmatpush1.bf16.msra.mxu0 %v488
        %554 = vmatprep.subr.bf16.mxu0 %v491
        %555 = vmatpush1.bf16.msra.mxu0 %v490
        %556 = vmatprep.subr.bf16.mxu0 %v493
        %557 = vmatpush1.bf16.msra.mxu0 %v492
        %558 = vmatprep.subr.bf16.mxu0 %v495
        %559 = vmatpush1.bf16.msra.mxu0 %v494
        %560 = vmatprep.subr.bf16.mxu0 %v497
        %561 = vmatpush1.bf16.msra.mxu0 %v496
        %562 = vmatprep.subr.bf16.mxu0 %v499
        %563 = vmatpush1.bf16.msra.mxu0 %v498
        %564 = vmatprep.subr.bf16.mxu0 %v501
        %565 = vmatpush1.bf16.msra.mxu0 %v500
        %566 = vmatprep.subr.bf16.mxu0 %v503
        %567 = vmatpush1.bf16.msra.mxu0 %v502
        %568 = vmatprep.mubr.bf16.mxu0 %v373
        %569 = vmatmul.mubr.bf16.gmra.mrb[0].mxu0 %v370
        %v570 = vpop.f32.mrb[0].mxu0
        %v571 = vadd.f32 0.0, %v570
        %v572 = vpop.f32.mrb[0].mxu0
        %v573 = vadd.f32 0.0, %v572
        %v574 = vpop.f32.mrb[0].mxu0
        %v575 = vadd.f32 0.0, %v574
        %v576 = vpop.f32.mrb[0].mxu0
        %v577 = vadd.f32 0.0, %v576
        %578 = vdwg.mxu0
        %v580 = vunpack.c.l.b16 %v285
        %v581 = vunpack.c.h.b16 %v285
        %v582 = vpack.c.b16 %v359, %v580
        %v583 = vpack.c.b16 %v360, %v581
        %v618 = vunpack.c.l.b16 %v287
        %v619 = vunpack.c.h.b16 %v287
        %v620 = vunpack.c.l.b16 %v288
        %v621 = vunpack.c.h.b16 %v288
        %v622 = vunpack.c.l.b16 %v289
        %v623 = vunpack.c.h.b16 %v289
        %v624 = vunpack.c.l.b16 %v290
        %v625 = vunpack.c.h.b16 %v290
        %v626 = vunpack.c.l.b16 %v291
        %v627 = vunpack.c.h.b16 %v291
        %v628 = vunpack.c.l.b16 %v292
        %v629 = vunpack.c.h.b16 %v292
        %v630 = vunpack.c.l.b16 %v293
        %v631 = vunpack.c.h.b16 %v293
        %v632 = vunpack.c.l.b16 %v294
        %v633 = vunpack.c.h.b16 %v294
        %v634 = vunpack.c.l.b16 %v295
        %v635 = vunpack.c.h.b16 %v295
        %v636 = vunpack.c.l.b16 %v296
        %v637 = vunpack.c.h.b16 %v296
        %v638 = vunpack.c.l.b16 %v297
        %v639 = vunpack.c.h.b16 %v297
        %v640 = vunpack.c.l.b16 %v298
        %v641 = vunpack.c.h.b16 %v298
        %v642 = vunpack.c.l.b16 %v299
        %v643 = vunpack.c.h.b16 %v299
        %v644 = vunpack.c.l.b16 %v300
        %v645 = vunpack.c.h.b16 %v300
        %v646 = vunpack.c.l.b16 %v301
        %v647 = vunpack.c.h.b16 %v301
        %v648 = vunpack.c.l.b16 %v302
        %v649 = vunpack.c.h.b16 %v302
        %v650 = vunpack.c.l.b16 %v303
        %v651 = vunpack.c.h.b16 %v303
        %v652 = vunpack.c.l.b16 %v304
        %v653 = vunpack.c.h.b16 %v304
        %v654 = vunpack.c.l.b16 %v305
        %v655 = vunpack.c.h.b16 %v305
        %v656 = vunpack.c.l.b16 %v306
        %v657 = vunpack.c.h.b16 %v306
        %v658 = vunpack.c.l.b16 %v307
        %v659 = vunpack.c.h.b16 %v307
        %v660 = vunpack.c.l.b16 %v308
        %v661 = vunpack.c.h.b16 %v308
        %v662 = vunpack.c.l.b16 %v309
        %v663 = vunpack.c.h.b16 %v309
        %v664 = vunpack.c.l.b16 %v310
        %v665 = vunpack.c.h.b16 %v310
        %v666 = vunpack.c.l.b16 %v311
        %v667 = vunpack.c.h.b16 %v311
        %v668 = vunpack.c.l.b16 %v312
        %v669 = vunpack.c.h.b16 %v312
        %v670 = vunpack.c.l.b16 %v313
        %v671 = vunpack.c.h.b16 %v313
        %v672 = vunpack.c.l.b16 %v314
        %v673 = vunpack.c.h.b16 %v314
        %v674 = vunpack.c.l.b16 %v315
        %v675 = vunpack.c.h.b16 %v315
        %v676 = vunpack.c.l.b16 %v316
        %v677 = vunpack.c.h.b16 %v316
        %v678 = vunpack.c.l.b16 %v317
        %v679 = vunpack.c.h.b16 %v317
        %v680 = vunpack.c.l.b16 %v318
        %v681 = vunpack.c.h.b16 %v318
        %v682 = vpack.c.b16 %v620, %v618
        %v683 = vpack.c.b16 %v621, %v619
        %v684 = vpack.c.b16 %v624, %v622
        %v685 = vpack.c.b16 %v625, %v623
        %v686 = vpack.c.b16 %v628, %v626
        %v687 = vpack.c.b16 %v629, %v627
        %v688 = vpack.c.b16 %v632, %v630
        %v689 = vpack.c.b16 %v633, %v631
        %v690 = vpack.c.b16 %v636, %v634
        %v691 = vpack.c.b16 %v637, %v635
        %v692 = vpack.c.b16 %v640, %v638
        %v693 = vpack.c.b16 %v641, %v639
        %v694 = vpack.c.b16 %v644, %v642
        %v695 = vpack.c.b16 %v645, %v643
        %v696 = vpack.c.b16 %v648, %v646
        %v697 = vpack.c.b16 %v649, %v647
        %v698 = vpack.c.b16 %v652, %v650
        %v699 = vpack.c.b16 %v653, %v651
        %v700 = vpack.c.b16 %v656, %v654
        %v701 = vpack.c.b16 %v657, %v655
        %v702 = vpack.c.b16 %v660, %v658
        %v703 = vpack.c.b16 %v661, %v659
        %v704 = vpack.c.b16 %v664, %v662
        %v705 = vpack.c.b16 %v665, %v663
        %v706 = vpack.c.b16 %v668, %v666
        %v707 = vpack.c.b16 %v669, %v667
        %v708 = vpack.c.b16 %v672, %v670
        %v709 = vpack.c.b16 %v673, %v671
        %v710 = vpack.c.b16 %v676, %v674
        %v711 = vpack.c.b16 %v677, %v675
        %v712 = vpack.c.b16 %v680, %v678
        %v713 = vpack.c.b16 %v681, %v679
        %746 = vmatprep.subr.bf16.mxu0 %v683
        %747 = vmatpush1.bf16.msra.mxu0 %v682
        %748 = vmatprep.subr.bf16.mxu0 %v685
        %749 = vmatpush1.bf16.msra.mxu0 %v684
        %750 = vmatprep.subr.bf16.mxu0 %v687
        %751 = vmatpush1.bf16.msra.mxu0 %v686
        %752 = vmatprep.subr.bf16.mxu0 %v689
        %753 = vmatpush1.bf16.msra.mxu0 %v688
        %754 = vmatprep.subr.bf16.mxu0 %v691
        %755 = vmatpush1.bf16.msra.mxu0 %v690
        %756 = vmatprep.subr.bf16.mxu0 %v693
        %757 = vmatpush1.bf16.msra.mxu0 %v692
        %758 = vmatprep.subr.bf16.mxu0 %v695
        %759 = vmatpush1.bf16.msra.mxu0 %v694
        %760 = vmatprep.subr.bf16.mxu0 %v697
        %761 = vmatpush1.bf16.msra.mxu0 %v696
        %762 = vmatprep.subr.bf16.mxu0 %v699
        %763 = vmatpush1.bf16.msra.mxu0 %v698
        %764 = vmatprep.subr.bf16.mxu0 %v701
        %765 = vmatpush1.bf16.msra.mxu0 %v700
        %766 = vmatprep.subr.bf16.mxu0 %v703
        %767 = vmatpush1.bf16.msra.mxu0 %v702
        %768 = vmatprep.subr.bf16.mxu0 %v705
        %769 = vmatpush1.bf16.msra.mxu0 %v704
        %770 = vmatprep.subr.bf16.mxu0 %v707
        %771 = vmatpush1.bf16.msra.mxu0 %v706
        %772 = vmatprep.subr.bf16.mxu0 %v709
        %773 = vmatpush1.bf16.msra.mxu0 %v708
        %774 = vmatprep.subr.bf16.mxu0 %v711
        %775 = vmatpush1.bf16.msra.mxu0 %v710
        %776 = vmatprep.subr.bf16.mxu0 %v713
        %777 = vmatpush1.bf16.msra.mxu0 %v712
        %778 = vmatprep.mubr.bf16.mxu0 %v583
        %779 = vmatmul.mubr.bf16.gmra.mrb[0].mxu0 %v582
        %v780 = vpop.f32.mrb[0].mxu0
        %v781 = vadd.f32 %v571, %v780
        %v782 = vpop.f32.mrb[0].mxu0
        %v783 = vadd.f32 %v573, %v782
        %v784 = vpop.f32.mrb[0].mxu0
        %v785 = vadd.f32 %v575, %v784
        %v786 = vpop.f32.mrb[0].mxu0
        %v787 = vadd.f32 %v577, %v786
        %788 = vdwg.mxu0
        %v789 = vld [vmem:[#allocation2] sm:$0xcc]
        %v790 = vld [vmem:[#allocation2 + $0x10] sm:$0x33]
        %s791 = scalar_lea.vmem [#allocation7], 512
        %v792 = vld [vmem:[%s791] sm:$0xff]
        %v793 = vld [vmem:[%s791 + $0x8] sm:$0xff]
        %v794 = vld [vmem:[%s791 + $0x10] sm:$0xff]
        %v795 = vld [vmem:[%s791 + $0x18] sm:$0xff]
        %v796 = vld [vmem:[%s791 + $0x20] sm:$0xff]
        %v797 = vld [vmem:[%s791 + $0x28] sm:$0xff]
        %v798 = vld [vmem:[%s791 + $0x30] sm:$0xff]
        %v799 = vld [vmem:[%s791 + $0x38] sm:$0xff]
        %v800 = vld [vmem:[%s791 + $0x40] sm:$0xff]
        %v801 = vld [vmem:[%s791 + $0x48] sm:$0xff]
        %v802 = vld [vmem:[%s791 + $0x50] sm:$0xff]
        %v803 = vld [vmem:[%s791 + $0x58] sm:$0xff]
        %v804 = vld [vmem:[%s791 + $0x60] sm:$0xff]
        %v805 = vld [vmem:[%s791 + $0x68] sm:$0xff]
        %v806 = vld [vmem:[%s791 + $0x70] sm:$0xff]
        %v807 = vld [vmem:[%s791 + $0x78] sm:$0xff]
        %v808 = vld [vmem:[%s791 + $0x80] sm:$0xff]
        %v809 = vld [vmem:[%s791 + $0x88] sm:$0xff]
        %v810 = vld [vmem:[%s791 + $0x90] sm:$0xff]
        %v811 = vld [vmem:[%s791 + $0x98] sm:$0xff]
        %v812 = vld [vmem:[%s791 + $0xa0] sm:$0xff]
        %v813 = vld [vmem:[%s791 + $0xa8] sm:$0xff]
        %v814 = vld [vmem:[%s791 + $0xb0] sm:$0xff]
        %v815 = vld [vmem:[%s791 + $0xb8] sm:$0xff]
        %v816 = vld [vmem:[%s791 + $0xc0] sm:$0xff]
        %v817 = vld [vmem:[%s791 + $0xc8] sm:$0xff]
        %v818 = vld [vmem:[%s791 + $0xd0] sm:$0xff]
        %v819 = vld [vmem:[%s791 + $0xd8] sm:$0xff]
        %v820 = vld [vmem:[%s791 + $0xe0] sm:$0xff]
        %v821 = vld [vmem:[%s791 + $0xe8] sm:$0xff]
        %v822 = vld [vmem:[%s791 + $0xf0] sm:$0xff]
        %v823 = vld [vmem:[%s791 + $0xf8] sm:$0xff]
        %v826 = vunpack.c.l.b16 %v789
        %v827 = vunpack.c.h.b16 %v789
        %v828 = vunpack.c.l.b16 %v790
        %v829 = vunpack.c.h.b16 %v790
        %v830 = vpack.c.b16 %v359, %v826
        %v831 = vpack.c.b16 %v360, %v827
        %v832 = vpack.c.b16 %v828, %v828
        %v833 = vpack.c.b16 %v829, %v829
        %vm834 = vcmask 1045504
        %v835 = vrot.slane %v830, 2
        %v836 = vrot.slane %v832, 2
        %v837 = vsel %vm834, %v835, %v836
        %v838 = vrot.slane %v831, 2
        %v839 = vrot.slane %v833, 2
        %v840 = vsel %vm834, %v838, %v839
        %v875 = vunpack.c.l.b16 %v792
        %v876 = vunpack.c.h.b16 %v792
        %v877 = vunpack.c.l.b16 %v793
        %v878 = vunpack.c.h.b16 %v793
        %v879 = vunpack.c.l.b16 %v794
        %v880 = vunpack.c.h.b16 %v794
        %v881 = vunpack.c.l.b16 %v795
        %v882 = vunpack.c.h.b16 %v795
        %v883 = vunpack.c.l.b16 %v796
        %v884 = vunpack.c.h.b16 %v796
        %v885 = vunpack.c.l.b16 %v797
        %v886 = vunpack.c.h.b16 %v797
        %v887 = vunpack.c.l.b16 %v798
        %v888 = vunpack.c.h.b16 %v798
        %v889 = vunpack.c.l.b16 %v799
        %v890 = vunpack.c.h.b16 %v799
        %v891 = vunpack.c.l.b16 %v800
        %v892 = vunpack.c.h.b16 %v800
        %v893 = vunpack.c.l.b16 %v801
        %v894 = vunpack.c.h.b16 %v801
        %v895 = vunpack.c.l.b16 %v802
        %v896 = vunpack.c.h.b16 %v802
        %v897 = vunpack.c.l.b16 %v803
        %v898 = vunpack.c.h.b16 %v803
        %v899 = vunpack.c.l.b16 %v804
        %v900 = vunpack.c.h.b16 %v804
        %v901 = vunpack.c.l.b16 %v805
        %v902 = vunpack.c.h.b16 %v805
        %v903 = vunpack.c.l.b16 %v806
        %v904 = vunpack.c.h.b16 %v806
        %v905 = vunpack.c.l.b16 %v807
        %v906 = vunpack.c.h.b16 %v807
        %v907 = vunpack.c.l.b16 %v808
        %v908 = vunpack.c.h.b16 %v808
        %v909 = vunpack.c.l.b16 %v809
        %v910 = vunpack.c.h.b16 %v809
        %v911 = vunpack.c.l.b16 %v810
        %v912 = vunpack.c.h.b16 %v810
        %v913 = vunpack.c.l.b16 %v811
        %v914 = vunpack.c.h.b16 %v811
        %v915 = vunpack.c.l.b16 %v812
        %v916 = vunpack.c.h.b16 %v812
        %v917 = vunpack.c.l.b16 %v813
        %v918 = vunpack.c.h.b16 %v813
        %v919 = vunpack.c.l.b16 %v814
        %v920 = vunpack.c.h.b16 %v814
        %v921 = vunpack.c.l.b16 %v815
        %v922 = vunpack.c.h.b16 %v815
        %v923 = vunpack.c.l.b16 %v816
        %v924 = vunpack.c.h.b16 %v816
        %v925 = vunpack.c.l.b16 %v817
        %v926 = vunpack.c.h.b16 %v817
        %v927 = vunpack.c.l.b16 %v818
        %v928 = vunpack.c.h.b16 %v818
        %v929 = vunpack.c.l.b16 %v819
        %v930 = vunpack.c.h.b16 %v819
        %v931 = vunpack.c.l.b16 %v820
        %v932 = vunpack.c.h.b16 %v820
        %v933 = vunpack.c.l.b16 %v821
        %v934 = vunpack.c.h.b16 %v821
        %v935 = vunpack.c.l.b16 %v822
        %v936 = vunpack.c.h.b16 %v822
        %v937 = vunpack.c.l.b16 %v823
        %v938 = vunpack.c.h.b16 %v823
        %v939 = vpack.c.b16 %v877, %v875
        %v940 = vpack.c.b16 %v878, %v876
        %v941 = vpack.c.b16 %v881, %v879
        %v942 = vpack.c.b16 %v882, %v880
        %v943 = vpack.c.b16 %v885, %v883
        %v944 = vpack.c.b16 %v886, %v884
        %v945 = vpack.c.b16 %v889, %v887
        %v946 = vpack.c.b16 %v890, %v888
        %v947 = vpack.c.b16 %v893, %v891
        %v948 = vpack.c.b16 %v894, %v892
        %v949 = vpack.c.b16 %v897, %v895
        %v950 = vpack.c.b16 %v898, %v896
        %v951 = vpack.c.b16 %v901, %v899
        %v952 = vpack.c.b16 %v902, %v900
        %v953 = vpack.c.b16 %v905, %v903
        %v954 = vpack.c.b16 %v906, %v904
        %v955 = vpack.c.b16 %v909, %v907
        %v956 = vpack.c.b16 %v910, %v908
        %v957 = vpack.c.b16 %v913, %v911
        %v958 = vpack.c.b16 %v914, %v912
        %v959 = vpack.c.b16 %v917, %v915
        %v960 = vpack.c.b16 %v918, %v916
        %v961 = vpack.c.b16 %v921, %v919
        %v962 = vpack.c.b16 %v922, %v920
        %v963 = vpack.c.b16 %v925, %v923
        %v964 = vpack.c.b16 %v926, %v924
        %v965 = vpack.c.b16 %v929, %v927
        %v966 = vpack.c.b16 %v930, %v928
        %v967 = vpack.c.b16 %v933, %v931
        %v968 = vpack.c.b16 %v934, %v932
        %v969 = vpack.c.b16 %v937, %v935
        %v970 = vpack.c.b16 %v938, %v936
        %1003 = vmatprep.subr.bf16.mxu0 %v940
        %1004 = vmatpush1.bf16.msra.mxu0 %v939
        %1005 = vmatprep.subr.bf16.mxu0 %v942
        %1006 = vmatpush1.bf16.msra.mxu0 %v941
        %1007 = vmatprep.subr.bf16.mxu0 %v944
        %1008 = vmatpush1.bf16.msra.mxu0 %v943
        %1009 = vmatprep.subr.bf16.mxu0 %v946
        %1010 = vmatpush1.bf16.msra.mxu0 %v945
        %1011 = vmatprep.subr.bf16.mxu0 %v948
        %1012 = vmatpush1.bf16.msra.mxu0 %v947
        %1013 = vmatprep.subr.bf16.mxu0 %v950
        %1014 = vmatpush1.bf16.msra.mxu0 %v949
        %1015 = vmatprep.subr.bf16.mxu0 %v952
        %1016 = vmatpush1.bf16.msra.mxu0 %v951
        %1017 = vmatprep.subr.bf16.mxu0 %v954
        %1018 = vmatpush1.bf16.msra.mxu0 %v953
        %1019 = vmatprep.subr.bf16.mxu0 %v956
        %1020 = vmatpush1.bf16.msra.mxu0 %v955
        %1021 = vmatprep.subr.bf16.mxu0 %v958
        %1022 = vmatpush1.bf16.msra.mxu0 %v957
        %1023 = vmatprep.subr.bf16.mxu0 %v960
        %1024 = vmatpush1.bf16.msra.mxu0 %v959
        %1025 = vmatprep.subr.bf16.mxu0 %v962
        %1026 = vmatpush1.bf16.msra.mxu0 %v961
        %1027 = vmatprep.subr.bf16.mxu0 %v964
        %1028 = vmatpush1.bf16.msra.mxu0 %v963
        %1029 = vmatprep.subr.bf16.mxu0 %v966
        %1030 = vmatpush1.bf16.msra.mxu0 %v965
        %1031 = vmatprep.subr.bf16.mxu0 %v968
        %1032 = vmatpush1.bf16.msra.mxu0 %v967
        %1033 = vmatprep.subr.bf16.mxu0 %v970
        %1034 = vmatpush1.bf16.msra.mxu0 %v969
        %1035 = vmatprep.mubr.bf16.mxu0 %v840
        %1036 = vmatmul.mubr.bf16.gmra.mrb[0].mxu0 %v837
        %v1037 = vpop.f32.mrb[0].mxu0
        %v1038 = vadd.f32 0.0, %v1037
        %v1039 = vpop.f32.mrb[0].mxu0
        %v1040 = vadd.f32 0.0, %v1039
        %v1041 = vpop.f32.mrb[0].mxu0
        %v1042 = vadd.f32 0.0, %v1041
        %v1043 = vpop.f32.mrb[0].mxu0
        %v1044 = vadd.f32 0.0, %v1043
        %1045 = vdwg.mxu0
        %v1046 = vadd.f32 %v781, %v1038
        %v1047 = vadd.f32 %v783, %v1040
        %v1048 = vadd.f32 %v785, %v1042
        %v1049 = vadd.f32 %v787, %v1044
        %v1051 = vlaneseq
        %v1052 = vshrl.u32 %v1051, 7
        %v1053 = vsub.s32 0, %v1052
        %v1054 = vrot.slane %v246, %v1053
        %v1055 = vlaneseq
        %v1056 = vshrl.u32 %v1055, 7
        %v1057 = vsub.s32 1, %v1056
        %v1058 = vrot.slane %v246, %v1057
        %v1061 = vmul.f32 %v1046, %v1054
        %v1062 = vmul.f32 %v1047, %v1058
        %v1063 = vmul.f32 %v1048, %v1054
        %v1064 = vmul.f32 %v1049, %v1058
        %v1066 = vlaneseq
        %v1067 = vshrl.u32 %v1066, 7
        %v1068 = vsub.s32 0, %v1067
        %v1069 = vrot.slane %v248, %v1068
        %v1070 = vlaneseq
        %v1071 = vshrl.u32 %v1070, 7
        %v1072 = vsub.s32 1, %v1071
        %v1073 = vrot.slane %v248, %v1072
        %v1076 = vadd.f32 %v1061, %v1069
        %v1077 = vadd.f32 %v1062, %v1073
        %v1078 = vadd.f32 %v1063, %v1069
        %v1079 = vadd.f32 %v1064, %v1073
        %v1080 = vmul.f32 %v1076, 0.01
        %v1081 = vmul.f32 %v1077, 0.01
        %v1082 = vmul.f32 %v1078, 0.01
        %v1083 = vmul.f32 %v1079, 0.01
        %v1084 = vmax.f32 %v1076, %v1080
        %v1085 = vmax.f32 %v1077, %v1081
        %v1086 = vmax.f32 %v1078, %v1082
        %v1087 = vmax.f32 %v1079, %v1083
        %v1088 = vpack.c.bf16 %v1086, %v1084
        %v1089 = vpack.c.bf16 %v1087, %v1085
        %v1092 = vunpack.c.l.b16 %v1088
        %v1093 = vunpack.c.l.b16 %v1089
        %v1094 = vunpack.c.h.b16 %v1088
        %v1095 = vunpack.c.h.b16 %v1089
        %v1096 = vpack.c.b16 %v1093, %v1092
        %v1097 = vpack.c.b16 %v1095, %v1094
        %v1098 = vrot.slane %v1096, 7
        %v1099 = vrot.slane %v1098, 4
        %v1100 = vrot.slane %v1097, 7
        %v1101 = vsel %vm273, %v1099, %v1100
        %v1102 = vrot.slane %v1100, 4
        %1106 = vst [vmem:[#allocation3] sm:$0xee] %v1098
        %1107 = vst [vmem:[#allocation3 + $0x8] sm:$0xff] %v1101
        %1108 = vst [vmem:[#allocation3 + $0x10] sm:$0x11] %v1102
        %v1109 = vld [vmem:[#allocation3] sm:$0xff]
        %v1110 = vld [vmem:[#allocation3 + $0x8] sm:$0xff]
        %v1111 = vld [vmem:[#allocation9] sm:$0xff]
        %v1112 = vld [vmem:[#allocation9 + $0x8] sm:$0xff]
        %v1113 = vld [vmem:[#allocation9 + $0x10] sm:$0xff]
        %v1114 = vld [vmem:[#allocation9 + $0x18] sm:$0xff]
        %v1115 = vld [vmem:[#allocation9 + $0x20] sm:$0xff]
        %v1116 = vld [vmem:[#allocation9 + $0x28] sm:$0xff]
        %v1117 = vld [vmem:[#allocation9 + $0x30] sm:$0xff]
        %v1118 = vld [vmem:[#allocation9 + $0x38] sm:$0xff]
        %v1119 = vld [vmem:[#allocation9 + $0x40] sm:$0xff]
        %v1120 = vld [vmem:[#allocation9 + $0x48] sm:$0xff]
        %v1121 = vld [vmem:[#allocation9 + $0x50] sm:$0xff]
        %v1122 = vld [vmem:[#allocation9 + $0x58] sm:$0xff]
        %v1123 = vld [vmem:[#allocation9 + $0x60] sm:$0xff]
        %v1124 = vld [vmem:[#allocation9 + $0x68] sm:$0xff]
        %v1125 = vld [vmem:[#allocation9 + $0x70] sm:$0xff]
        %v1126 = vld [vmem:[#allocation9 + $0x78] sm:$0xff]
        %v1127 = vld [vmem:[#allocation9 + $0x80] sm:$0xff]
        %v1128 = vld [vmem:[#allocation9 + $0x88] sm:$0xff]
        %v1129 = vld [vmem:[#allocation9 + $0x90] sm:$0xff]
        %v1130 = vld [vmem:[#allocation9 + $0x98] sm:$0xff]
        %v1131 = vld [vmem:[#allocation9 + $0xa0] sm:$0xff]
        %v1132 = vld [vmem:[#allocation9 + $0xa8] sm:$0xff]
        %v1133 = vld [vmem:[#allocation9 + $0xb0] sm:$0xff]
        %v1134 = vld [vmem:[#allocation9 + $0xb8] sm:$0xff]
        %v1135 = vld [vmem:[#allocation9 + $0xc0] sm:$0xff]
        %v1136 = vld [vmem:[#allocation9 + $0xc8] sm:$0xff]
        %v1137 = vld [vmem:[#allocation9 + $0xd0] sm:$0xff]
        %v1138 = vld [vmem:[#allocation9 + $0xd8] sm:$0xff]
        %v1139 = vld [vmem:[#allocation9 + $0xe0] sm:$0xff]
        %v1140 = vld [vmem:[#allocation9 + $0xe8] sm:$0xff]
        %v1141 = vld [vmem:[#allocation9 + $0xf0] sm:$0xff]
        %v1142 = vld [vmem:[#allocation9 + $0xf8] sm:$0xff]
        %v1143 = vld [vmem:[#allocation3] sm:$0xee]
        %v1144 = vld [vmem:[#allocation3 + $0x10] sm:$0x11]
        %s1145 = scalar_lea.vmem [#allocation9], 256
        %v1146 = vld [vmem:[%s1145] sm:$0xff]
        %v1147 = vld [vmem:[%s1145 + $0x8] sm:$0xff]
        %v1148 = vld [vmem:[%s1145 + $0x10] sm:$0xff]
        %v1149 = vld [vmem:[%s1145 + $0x18] sm:$0xff]
        %v1150 = vld [vmem:[%s1145 + $0x20] sm:$0xff]
        %v1151 = vld [vmem:[%s1145 + $0x28] sm:$0xff]
        %v1152 = vld [vmem:[%s1145 + $0x30] sm:$0xff]
        %v1153 = vld [vmem:[%s1145 + $0x38] sm:$0xff]
        %v1154 = vld [vmem:[%s1145 + $0x40] sm:$0xff]
        %v1155 = vld [vmem:[%s1145 + $0x48] sm:$0xff]
        %v1156 = vld [vmem:[%s1145 + $0x50] sm:$0xff]
        %v1157 = vld [vmem:[%s1145 + $0x58] sm:$0xff]
        %v1158 = vld [vmem:[%s1145 + $0x60] sm:$0xff]
        %v1159 = vld [vmem:[%s1145 + $0x68] sm:$0xff]
        %v1160 = vld [vmem:[%s1145 + $0x70] sm:$0xff]
        %v1161 = vld [vmem:[%s1145 + $0x78] sm:$0xff]
        %v1162 = vld [vmem:[%s1145 + $0x80] sm:$0xff]
        %v1163 = vld [vmem:[%s1145 + $0x88] sm:$0xff]
        %v1164 = vld [vmem:[%s1145 + $0x90] sm:$0xff]
        %v1165 = vld [vmem:[%s1145 + $0x98] sm:$0xff]
        %v1166 = vld [vmem:[%s1145 + $0xa0] sm:$0xff]
        %v1167 = vld [vmem:[%s1145 + $0xa8] sm:$0xff]
        %v1168 = vld [vmem:[%s1145 + $0xb0] sm:$0xff]
        %v1169 = vld [vmem:[%s1145 + $0xb8] sm:$0xff]
        %v1170 = vld [vmem:[%s1145 + $0xc0] sm:$0xff]
        %v1171 = vld [vmem:[%s1145 + $0xc8] sm:$0xff]
        %v1172 = vld [vmem:[%s1145 + $0xd0] sm:$0xff]
        %v1173 = vld [vmem:[%s1145 + $0xd8] sm:$0xff]
        %v1174 = vld [vmem:[%s1145 + $0xe0] sm:$0xff]
        %v1175 = vld [vmem:[%s1145 + $0xe8] sm:$0xff]
        %v1176 = vld [vmem:[%s1145 + $0xf0] sm:$0xff]
        %v1177 = vld [vmem:[%s1145 + $0xf8] sm:$0xff]
        %v1181 = vunpack.c.l.b16 %v1143
        %v1182 = vunpack.c.h.b16 %v1143
        %v1183 = vunpack.c.l.b16 %v1110
        %v1184 = vunpack.c.h.b16 %v1110
        %v1185 = vunpack.c.l.b16 %v1144
        %v1186 = vunpack.c.h.b16 %v1144
        %v1187 = vpack.c.b16 %v1183, %v1181
        %v1188 = vpack.c.b16 %v1184, %v1182
        %v1189 = vpack.c.b16 %v1185, %v1185
        %v1190 = vpack.c.b16 %v1186, %v1186
        %v1191 = vrot.slane %v1187, 1
        %v1192 = vrot.slane %v1189, 1
        %v1193 = vsel %vm367, %v1191, %v1192
        %v1194 = vrot.slane %v1188, 1
        %v1195 = vrot.slane %v1190, 1
        %v1196 = vsel %vm367, %v1194, %v1195
        %v1231 = vunpack.c.l.b16 %v1146
        %v1232 = vunpack.c.h.b16 %v1146
        %v1233 = vunpack.c.l.b16 %v1147
        %v1234 = vunpack.c.h.b16 %v1147
        %v1235 = vunpack.c.l.b16 %v1148
        %v1236 = vunpack.c.h.b16 %v1148
        %v1237 = vunpack.c.l.b16 %v1149
        %v1238 = vunpack.c.h.b16 %v1149
        %v1239 = vunpack.c.l.b16 %v1150
        %v1240 = vunpack.c.h.b16 %v1150
        %v1241 = vunpack.c.l.b16 %v1151
        %v1242 = vunpack.c.h.b16 %v1151
        %v1243 = vunpack.c.l.b16 %v1152
        %v1244 = vunpack.c.h.b16 %v1152
        %v1245 = vunpack.c.l.b16 %v1153
        %v1246 = vunpack.c.h.b16 %v1153
        %v1247 = vunpack.c.l.b16 %v1154
        %v1248 = vunpack.c.h.b16 %v1154
        %v1249 = vunpack.c.l.b16 %v1155
        %v1250 = vunpack.c.h.b16 %v1155
        %v1251 = vunpack.c.l.b16 %v1156
        %v1252 = vunpack.c.h.b16 %v1156
        %v1253 = vunpack.c.l.b16 %v1157
        %v1254 = vunpack.c.h.b16 %v1157
        %v1255 = vunpack.c.l.b16 %v1158
        %v1256 = vunpack.c.h.b16 %v1158
        %v1257 = vunpack.c.l.b16 %v1159
        %v1258 = vunpack.c.h.b16 %v1159
        %v1259 = vunpack.c.l.b16 %v1160
        %v1260 = vunpack.c.h.b16 %v1160
        %v1261 = vunpack.c.l.b16 %v1161
        %v1262 = vunpack.c.h.b16 %v1161
        %v1263 = vunpack.c.l.b16 %v1162
        %v1264 = vunpack.c.h.b16 %v1162
        %v1265 = vunpack.c.l.b16 %v1163
        %v1266 = vunpack.c.h.b16 %v1163
        %v1267 = vunpack.c.l.b16 %v1164
        %v1268 = vunpack.c.h.b16 %v1164
        %v1269 = vunpack.c.l.b16 %v1165
        %v1270 = vunpack.c.h.b16 %v1165
        %v1271 = vunpack.c.l.b16 %v1166
        %v1272 = vunpack.c.h.b16 %v1166
        %v1273 = vunpack.c.l.b16 %v1167
        %v1274 = vunpack.c.h.b16 %v1167
        %v1275 = vunpack.c.l.b16 %v1168
        %v1276 = vunpack.c.h.b16 %v1168
        %v1277 = vunpack.c.l.b16 %v1169
        %v1278 = vunpack.c.h.b16 %v1169
        %v1279 = vunpack.c.l.b16 %v1170
        %v1280 = vunpack.c.h.b16 %v1170
        %v1281 = vunpack.c.l.b16 %v1171
        %v1282 = vunpack.c.h.b16 %v1171
        %v1283 = vunpack.c.l.b16 %v1172
        %v1284 = vunpack.c.h.b16 %v1172
        %v1285 = vunpack.c.l.b16 %v1173
        %v1286 = vunpack.c.h.b16 %v1173
        %v1287 = vunpack.c.l.b16 %v1174
        %v1288 = vunpack.c.h.b16 %v1174
        %v1289 = vunpack.c.l.b16 %v1175
        %v1290 = vunpack.c.h.b16 %v1175
        %v1291 = vunpack.c.l.b16 %v1176
        %v1292 = vunpack.c.h.b16 %v1176
        %v1293 = vunpack.c.l.b16 %v1177
        %v1294 = vunpack.c.h.b16 %v1177
        %v1295 = vpack.c.b16 %v1233, %v1231
        %v1296 = vpack.c.b16 %v1234, %v1232
        %v1297 = vpack.c.b16 %v1237, %v1235
        %v1298 = vpack.c.b16 %v1238, %v1236
        %v1299 = vpack.c.b16 %v1241, %v1239
        %v1300 = vpack.c.b16 %v1242, %v1240
        %v1301 = vpack.c.b16 %v1245, %v1243
        %v1302 = vpack.c.b16 %v1246, %v1244
        %v1303 = vpack.c.b16 %v1249, %v1247
        %v1304 = vpack.c.b16 %v1250, %v1248
        %v1305 = vpack.c.b16 %v1253, %v1251
        %v1306 = vpack.c.b16 %v1254, %v1252
        %v1307 = vpack.c.b16 %v1257, %v1255
        %v1308 = vpack.c.b16 %v1258, %v1256
        %v1309 = vpack.c.b16 %v1261, %v1259
        %v1310 = vpack.c.b16 %v1262, %v1260
        %v1311 = vpack.c.b16 %v1265, %v1263
        %v1312 = vpack.c.b16 %v1266, %v1264
        %v1313 = vpack.c.b16 %v1269, %v1267
        %v1314 = vpack.c.b16 %v1270, %v1268
        %v1315 = vpack.c.b16 %v1273, %v1271
        %v1316 = vpack.c.b16 %v1274, %v1272
        %v1317 = vpack.c.b16 %v1277, %v1275
        %v1318 = vpack.c.b16 %v1278, %v1276
        %v1319 = vpack.c.b16 %v1281, %v1279
        %v1320 = vpack.c.b16 %v1282, %v1280
        %v1321 = vpack.c.b16 %v1285, %v1283
        %v1322 = vpack.c.b16 %v1286, %v1284
        %v1323 = vpack.c.b16 %v1289, %v1287
        %v1324 = vpack.c.b16 %v1290, %v1288
        %v1325 = vpack.c.b16 %v1293, %v1291
        %v1326 = vpack.c.b16 %v1294, %v1292
        %1359 = vmatprep.subr.bf16.mxu0 %v1296
        %1360 = vmatpush1.bf16.msra.mxu0 %v1295
        %1361 = vmatprep.subr.bf16.mxu0 %v1298
        %1362 = vmatpush1.bf16.msra.mxu0 %v1297
        %1363 = vmatprep.subr.bf16.mxu0 %v1300
        %1364 = vmatpush1.bf16.msra.mxu0 %v1299
        %1365 = vmatprep.subr.bf16.mxu0 %v1302
        %1366 = vmatpush1.bf16.msra.mxu0 %v1301
        %1367 = vmatprep.subr.bf16.mxu0 %v1304
        %1368 = vmatpush1.bf16.msra.mxu0 %v1303
        %1369 = vmatprep.subr.bf16.mxu0 %v1306
        %1370 = vmatpush1.bf16.msra.mxu0 %v1305
        %1371 = vmatprep.subr.bf16.mxu0 %v1308
        %1372 = vmatpush1.bf16.msra.mxu0 %v1307
        %1373 = vmatprep.subr.bf16.mxu0 %v1310
        %1374 = vmatpush1.bf16.msra.mxu0 %v1309
        %1375 = vmatprep.subr.bf16.mxu0 %v1312
        %1376 = vmatpush1.bf16.msra.mxu0 %v1311
        %1377 = vmatprep.subr.bf16.mxu0 %v1314
        %1378 = vmatpush1.bf16.msra.mxu0 %v1313
        %1379 = vmatprep.subr.bf16.mxu0 %v1316
        %1380 = vmatpush1.bf16.msra.mxu0 %v1315
        %1381 = vmatprep.subr.bf16.mxu0 %v1318
        %1382 = vmatpush1.bf16.msra.mxu0 %v1317
        %1383 = vmatprep.subr.bf16.mxu0 %v1320
        %1384 = vmatpush1.bf16.msra.mxu0 %v1319
        %1385 = vmatprep.subr.bf16.mxu0 %v1322
        %1386 = vmatpush1.bf16.msra.mxu0 %v1321
        %1387 = vmatprep.subr.bf16.mxu0 %v1324
        %1388 = vmatpush1.bf16.msra.mxu0 %v1323
        %1389 = vmatprep.subr.bf16.mxu0 %v1326
        %1390 = vmatpush1.bf16.msra.mxu0 %v1325
        %1391 = vmatprep.mubr.bf16.mxu0 %v1196
        %1392 = vmatmul.mubr.bf16.gmra.mrb[0].mxu0 %v1193
        %v1393 = vpop.f32.mrb[0].mxu0
        %v1394 = vadd.f32 0.0, %v1393
        %v1395 = vpop.f32.mrb[0].mxu0
        %v1396 = vadd.f32 0.0, %v1395
        %v1397 = vpop.f32.mrb[0].mxu0
        %v1398 = vadd.f32 0.0, %v1397
        %v1399 = vpop.f32.mrb[0].mxu0
        %v1400 = vadd.f32 0.0, %v1399
        %1401 = vdwg.mxu0
        %v1403 = vunpack.c.l.b16 %v1109
        %v1404 = vunpack.c.h.b16 %v1109
        %v1405 = vpack.c.b16 %v1183, %v1403
        %v1406 = vpack.c.b16 %v1184, %v1404
        %v1441 = vunpack.c.l.b16 %v1111
        %v1442 = vunpack.c.h.b16 %v1111
        %v1443 = vunpack.c.l.b16 %v1112
        %v1444 = vunpack.c.h.b16 %v1112
        %v1445 = vunpack.c.l.b16 %v1113
        %v1446 = vunpack.c.h.b16 %v1113
        %v1447 = vunpack.c.l.b16 %v1114
        %v1448 = vunpack.c.h.b16 %v1114
        %v1449 = vunpack.c.l.b16 %v1115
        %v1450 = vunpack.c.h.b16 %v1115
        %v1451 = vunpack.c.l.b16 %v1116
        %v1452 = vunpack.c.h.b16 %v1116
        %v1453 = vunpack.c.l.b16 %v1117
        %v1454 = vunpack.c.h.b16 %v1117
        %v1455 = vunpack.c.l.b16 %v1118
        %v1456 = vunpack.c.h.b16 %v1118
        %v1457 = vunpack.c.l.b16 %v1119
        %v1458 = vunpack.c.h.b16 %v1119
        %v1459 = vunpack.c.l.b16 %v1120
        %v1460 = vunpack.c.h.b16 %v1120
        %v1461 = vunpack.c.l.b16 %v1121
        %v1462 = vunpack.c.h.b16 %v1121
        %v1463 = vunpack.c.l.b16 %v1122
        %v1464 = vunpack.c.h.b16 %v1122
        %v1465 = vunpack.c.l.b16 %v1123
        %v1466 = vunpack.c.h.b16 %v1123
        %v1467 = vunpack.c.l.b16 %v1124
        %v1468 = vunpack.c.h.b16 %v1124
        %v1469 = vunpack.c.l.b16 %v1125
        %v1470 = vunpack.c.h.b16 %v1125
        %v1471 = vunpack.c.l.b16 %v1126
        %v1472 = vunpack.c.h.b16 %v1126
        %v1473 = vunpack.c.l.b16 %v1127
        %v1474 = vunpack.c.h.b16 %v1127
        %v1475 = vunpack.c.l.b16 %v1128
        %v1476 = vunpack.c.h.b16 %v1128
        %v1477 = vunpack.c.l.b16 %v1129
        %v1478 = vunpack.c.h.b16 %v1129
        %v1479 = vunpack.c.l.b16 %v1130
        %v1480 = vunpack.c.h.b16 %v1130
        %v1481 = vunpack.c.l.b16 %v1131
        %v1482 = vunpack.c.h.b16 %v1131
        %v1483 = vunpack.c.l.b16 %v1132
        %v1484 = vunpack.c.h.b16 %v1132
        %v1485 = vunpack.c.l.b16 %v1133
        %v1486 = vunpack.c.h.b16 %v1133
        %v1487 = vunpack.c.l.b16 %v1134
        %v1488 = vunpack.c.h.b16 %v1134
        %v1489 = vunpack.c.l.b16 %v1135
        %v1490 = vunpack.c.h.b16 %v1135
        %v1491 = vunpack.c.l.b16 %v1136
        %v1492 = vunpack.c.h.b16 %v1136
        %v1493 = vunpack.c.l.b16 %v1137
        %v1494 = vunpack.c.h.b16 %v1137
        %v1495 = vunpack.c.l.b16 %v1138
        %v1496 = vunpack.c.h.b16 %v1138
        %v1497 = vunpack.c.l.b16 %v1139
        %v1498 = vunpack.c.h.b16 %v1139
        %v1499 = vunpack.c.l.b16 %v1140
        %v1500 = vunpack.c.h.b16 %v1140
        %v1501 = vunpack.c.l.b16 %v1141
        %v1502 = vunpack.c.h.b16 %v1141
        %v1503 = vunpack.c.l.b16 %v1142
        %v1504 = vunpack.c.h.b16 %v1142
        %v1505 = vpack.c.b16 %v1443, %v1441
        %v1506 = vpack.c.b16 %v1444, %v1442
        %v1507 = vpack.c.b16 %v1447, %v1445
        %v1508 = vpack.c.b16 %v1448, %v1446
        %v1509 = vpack.c.b16 %v1451, %v1449
        %v1510 = vpack.c.b16 %v1452, %v1450
        %v1511 = vpack.c.b16 %v1455, %v1453
        %v1512 = vpack.c.b16 %v1456, %v1454
        %v1513 = vpack.c.b16 %v1459, %v1457
        %v1514 = vpack.c.b16 %v1460, %v1458
        %v1515 = vpack.c.b16 %v1463, %v1461
        %v1516 = vpack.c.b16 %v1464, %v1462
        %v1517 = vpack.c.b16 %v1467, %v1465
        %v1518 = vpack.c.b16 %v1468, %v1466
        %v1519 = vpack.c.b16 %v1471, %v1469
        %v1520 = vpack.c.b16 %v1472, %v1470
        %v1521 = vpack.c.b16 %v1475, %v1473
        %v1522 = vpack.c.b16 %v1476, %v1474
        %v1523 = vpack.c.b16 %v1479, %v1477
        %v1524 = vpack.c.b16 %v1480, %v1478
        %v1525 = vpack.c.b16 %v1483, %v1481
        %v1526 = vpack.c.b16 %v1484, %v1482
        %v1527 = vpack.c.b16 %v1487, %v1485
        %v1528 = vpack.c.b16 %v1488, %v1486
        %v1529 = vpack.c.b16 %v1491, %v1489
        %v1530 = vpack.c.b16 %v1492, %v1490
        %v1531 = vpack.c.b16 %v1495, %v1493
        %v1532 = vpack.c.b16 %v1496, %v1494
        %v1533 = vpack.c.b16 %v1499, %v1497
        %v1534 = vpack.c.b16 %v1500, %v1498
        %v1535 = vpack.c.b16 %v1503, %v1501
        %v1536 = vpack.c.b16 %v1504, %v1502
        %1569 = vmatprep.subr.bf16.mxu0 %v1506
        %1570 = vmatpush1.bf16.msra.mxu0 %v1505
        %1571 = vmatprep.subr.bf16.mxu0 %v1508
        %1572 = vmatpush1.bf16.msra.mxu0 %v1507
        %1573 = vmatprep.subr.bf16.mxu0 %v1510
        %1574 = vmatpush1.bf16.msra.mxu0 %v1509
        %1575 = vmatprep.subr.bf16.mxu0 %v1512
        %1576 = vmatpush1.bf16.msra.mxu0 %v1511
        %1577 = vmatprep.subr.bf16.mxu0 %v1514
        %1578 = vmatpush1.bf16.msra.mxu0 %v1513
        %1579 = vmatprep.subr.bf16.mxu0 %v1516
        %1580 = vmatpush1.bf16.msra.mxu0 %v1515
        %1581 = vmatprep.subr.bf16.mxu0 %v1518
        %1582 = vmatpush1.bf16.msra.mxu0 %v1517
        %1583 = vmatprep.subr.bf16.mxu0 %v1520
        %1584 = vmatpush1.bf16.msra.mxu0 %v1519
        %1585 = vmatprep.subr.bf16.mxu0 %v1522
        %1586 = vmatpush1.bf16.msra.mxu0 %v1521
        %1587 = vmatprep.subr.bf16.mxu0 %v1524
        %1588 = vmatpush1.bf16.msra.mxu0 %v1523
        %1589 = vmatprep.subr.bf16.mxu0 %v1526
        %1590 = vmatpush1.bf16.msra.mxu0 %v1525
        %1591 = vmatprep.subr.bf16.mxu0 %v1528
        %1592 = vmatpush1.bf16.msra.mxu0 %v1527
        %1593 = vmatprep.subr.bf16.mxu0 %v1530
        %1594 = vmatpush1.bf16.msra.mxu0 %v1529
        %1595 = vmatprep.subr.bf16.mxu0 %v1532
        %1596 = vmatpush1.bf16.msra.mxu0 %v1531
        %1597 = vmatprep.subr.bf16.mxu0 %v1534
        %1598 = vmatpush1.bf16.msra.mxu0 %v1533
        %1599 = vmatprep.subr.bf16.mxu0 %v1536
        %1600 = vmatpush1.bf16.msra.mxu0 %v1535
        %1601 = vmatprep.mubr.bf16.mxu0 %v1406
        %1602 = vmatmul.mubr.bf16.gmra.mrb[0].mxu0 %v1405
        %v1603 = vpop.f32.mrb[0].mxu0
        %v1604 = vadd.f32 %v1394, %v1603
        %v1605 = vpop.f32.mrb[0].mxu0
        %v1606 = vadd.f32 %v1396, %v1605
        %v1607 = vpop.f32.mrb[0].mxu0
        %v1608 = vadd.f32 %v1398, %v1607
        %v1609 = vpop.f32.mrb[0].mxu0
        %v1610 = vadd.f32 %v1400, %v1609
        %1611 = vdwg.mxu0
        %v1612 = vld [vmem:[#allocation3] sm:$0xcc]
        %v1613 = vld [vmem:[#allocation3 + $0x10] sm:$0x33]
        %s1614 = scalar_lea.vmem [#allocation9], 512
        %v1615 = vld [vmem:[%s1614] sm:$0xff]
        %v1616 = vld [vmem:[%s1614 + $0x8] sm:$0xff]
        %v1617 = vld [vmem:[%s1614 + $0x10] sm:$0xff]
        %v1618 = vld [vmem:[%s1614 + $0x18] sm:$0xff]
        %v1619 = vld [vmem:[%s1614 + $0x20] sm:$0xff]
        %v1620 = vld [vmem:[%s1614 + $0x28] sm:$0xff]
        %v1621 = vld [vmem:[%s1614 + $0x30] sm:$0xff]
        %v1622 = vld [vmem:[%s1614 + $0x38] sm:$0xff]
        %v1623 = vld [vmem:[%s1614 + $0x40] sm:$0xff]
        %v1624 = vld [vmem:[%s1614 + $0x48] sm:$0xff]
        %v1625 = vld [vmem:[%s1614 + $0x50] sm:$0xff]
        %v1626 = vld [vmem:[%s1614 + $0x58] sm:$0xff]
        %v1627 = vld [vmem:[%s1614 + $0x60] sm:$0xff]
        %v1628 = vld [vmem:[%s1614 + $0x68] sm:$0xff]
        %v1629 = vld [vmem:[%s1614 + $0x70] sm:$0xff]
        %v1630 = vld [vmem:[%s1614 + $0x78] sm:$0xff]
        %v1631 = vld [vmem:[%s1614 + $0x80] sm:$0xff]
        %v1632 = vld [vmem:[%s1614 + $0x88] sm:$0xff]
        %v1633 = vld [vmem:[%s1614 + $0x90] sm:$0xff]
        %v1634 = vld [vmem:[%s1614 + $0x98] sm:$0xff]
        %v1635 = vld [vmem:[%s1614 + $0xa0] sm:$0xff]
        %v1636 = vld [vmem:[%s1614 + $0xa8] sm:$0xff]
        %v1637 = vld [vmem:[%s1614 + $0xb0] sm:$0xff]
        %v1638 = vld [vmem:[%s1614 + $0xb8] sm:$0xff]
        %v1639 = vld [vmem:[%s1614 + $0xc0] sm:$0xff]
        %v1640 = vld [vmem:[%s1614 + $0xc8] sm:$0xff]
        %v1641 = vld [vmem:[%s1614 + $0xd0] sm:$0xff]
        %v1642 = vld [vmem:[%s1614 + $0xd8] sm:$0xff]
        %v1643 = vld [vmem:[%s1614 + $0xe0] sm:$0xff]
        %v1644 = vld [vmem:[%s1614 + $0xe8] sm:$0xff]
        %v1645 = vld [vmem:[%s1614 + $0xf0] sm:$0xff]
        %v1646 = vld [vmem:[%s1614 + $0xf8] sm:$0xff]
        %v1649 = vunpack.c.l.b16 %v1612
        %v1650 = vunpack.c.h.b16 %v1612
        %v1651 = vunpack.c.l.b16 %v1613
        %v1652 = vunpack.c.h.b16 %v1613
        %v1653 = vpack.c.b16 %v1183, %v1649
        %v1654 = vpack.c.b16 %v1184, %v1650
        %v1655 = vpack.c.b16 %v1651, %v1651
        %v1656 = vpack.c.b16 %v1652, %v1652
        %v1657 = vrot.slane %v1653, 2
        %v1658 = vrot.slane %v1655, 2
        %v1659 = vsel %vm834, %v1657, %v1658
        %v1660 = vrot.slane %v1654, 2
        %v1661 = vrot.slane %v1656, 2
        %v1662 = vsel %vm834, %v1660, %v1661
        %v1697 = vunpack.c.l.b16 %v1615
        %v1698 = vunpack.c.h.b16 %v1615
        %v1699 = vunpack.c.l.b16 %v1616
        %v1700 = vunpack.c.h.b16 %v1616
        %v1701 = vunpack.c.l.b16 %v1617
        %v1702 = vunpack.c.h.b16 %v1617
        %v1703 = vunpack.c.l.b16 %v1618
        %v1704 = vunpack.c.h.b16 %v1618
        %v1705 = vunpack.c.l.b16 %v1619
        %v1706 = vunpack.c.h.b16 %v1619
        %v1707 = vunpack.c.l.b16 %v1620
        %v1708 = vunpack.c.h.b16 %v1620
        %v1709 = vunpack.c.l.b16 %v1621
        %v1710 = vunpack.c.h.b16 %v1621
        %v1711 = vunpack.c.l.b16 %v1622
        %v1712 = vunpack.c.h.b16 %v1622
        %v1713 = vunpack.c.l.b16 %v1623
        %v1714 = vunpack.c.h.b16 %v1623
        %v1715 = vunpack.c.l.b16 %v1624
        %v1716 = vunpack.c.h.b16 %v1624
        %v1717 = vunpack.c.l.b16 %v1625
        %v1718 = vunpack.c.h.b16 %v1625
        %v1719 = vunpack.c.l.b16 %v1626
        %v1720 = vunpack.c.h.b16 %v1626
        %v1721 = vunpack.c.l.b16 %v1627
        %v1722 = vunpack.c.h.b16 %v1627
        %v1723 = vunpack.c.l.b16 %v1628
        %v1724 = vunpack.c.h.b16 %v1628
        %v1725 = vunpack.c.l.b16 %v1629
        %v1726 = vunpack.c.h.b16 %v1629
        %v1727 = vunpack.c.l.b16 %v1630
        %v1728 = vunpack.c.h.b16 %v1630
        %v1729 = vunpack.c.l.b16 %v1631
        %v1730 = vunpack.c.h.b16 %v1631
        %v1731 = vunpack.c.l.b16 %v1632
        %v1732 = vunpack.c.h.b16 %v1632
        %v1733 = vunpack.c.l.b16 %v1633
        %v1734 = vunpack.c.h.b16 %v1633
        %v1735 = vunpack.c.l.b16 %v1634
        %v1736 = vunpack.c.h.b16 %v1634
        %v1737 = vunpack.c.l.b16 %v1635
        %v1738 = vunpack.c.h.b16 %v1635
        %v1739 = vunpack.c.l.b16 %v1636
        %v1740 = vunpack.c.h.b16 %v1636
        %v1741 = vunpack.c.l.b16 %v1637
        %v1742 = vunpack.c.h.b16 %v1637
        %v1743 = vunpack.c.l.b16 %v1638
        %v1744 = vunpack.c.h.b16 %v1638
        %v1745 = vunpack.c.l.b16 %v1639
        %v1746 = vunpack.c.h.b16 %v1639
        %v1747 = vunpack.c.l.b16 %v1640
        %v1748 = vunpack.c.h.b16 %v1640
        %v1749 = vunpack.c.l.b16 %v1641
        %v1750 = vunpack.c.h.b16 %v1641
        %v1751 = vunpack.c.l.b16 %v1642
        %v1752 = vunpack.c.h.b16 %v1642
        %v1753 = vunpack.c.l.b16 %v1643
        %v1754 = vunpack.c.h.b16 %v1643
        %v1755 = vunpack.c.l.b16 %v1644
        %v1756 = vunpack.c.h.b16 %v1644
        %v1757 = vunpack.c.l.b16 %v1645
        %v1758 = vunpack.c.h.b16 %v1645
        %v1759 = vunpack.c.l.b16 %v1646
        %v1760 = vunpack.c.h.b16 %v1646
        %v1761 = vpack.c.b16 %v1699, %v1697
        %v1762 = vpack.c.b16 %v1700, %v1698
        %v1763 = vpack.c.b16 %v1703, %v1701
        %v1764 = vpack.c.b16 %v1704, %v1702
        %v1765 = vpack.c.b16 %v1707, %v1705
        %v1766 = vpack.c.b16 %v1708, %v1706
        %v1767 = vpack.c.b16 %v1711, %v1709
        %v1768 = vpack.c.b16 %v1712, %v1710
        %v1769 = vpack.c.b16 %v1715, %v1713
        %v1770 = vpack.c.b16 %v1716, %v1714
        %v1771 = vpack.c.b16 %v1719, %v1717
        %v1772 = vpack.c.b16 %v1720, %v1718
        %v1773 = vpack.c.b16 %v1723, %v1721
        %v1774 = vpack.c.b16 %v1724, %v1722
        %v1775 = vpack.c.b16 %v1727, %v1725
        %v1776 = vpack.c.b16 %v1728, %v1726
        %v1777 = vpack.c.b16 %v1731, %v1729
        %v1778 = vpack.c.b16 %v1732, %v1730
        %v1779 = vpack.c.b16 %v1735, %v1733
        %v1780 = vpack.c.b16 %v1736, %v1734
        %v1781 = vpack.c.b16 %v1739, %v1737
        %v1782 = vpack.c.b16 %v1740, %v1738
        %v1783 = vpack.c.b16 %v1743, %v1741
        %v1784 = vpack.c.b16 %v1744, %v1742
        %v1785 = vpack.c.b16 %v1747, %v1745
        %v1786 = vpack.c.b16 %v1748, %v1746
        %v1787 = vpack.c.b16 %v1751, %v1749
        %v1788 = vpack.c.b16 %v1752, %v1750
        %v1789 = vpack.c.b16 %v1755, %v1753
        %v1790 = vpack.c.b16 %v1756, %v1754
        %v1791 = vpack.c.b16 %v1759, %v1757
        %v1792 = vpack.c.b16 %v1760, %v1758
        %1825 = vmatprep.subr.bf16.mxu0 %v1762
        %1826 = vmatpush1.bf16.msra.mxu0 %v1761
        %1827 = vmatprep.subr.bf16.mxu0 %v1764
        %1828 = vmatpush1.bf16.msra.mxu0 %v1763
        %1829 = vmatprep.subr.bf16.mxu0 %v1766
        %1830 = vmatpush1.bf16.msra.mxu0 %v1765
        %1831 = vmatprep.subr.bf16.mxu0 %v1768
        %1832 = vmatpush1.bf16.msra.mxu0 %v1767
        %1833 = vmatprep.subr.bf16.mxu0 %v1770
        %1834 = vmatpush1.bf16.msra.mxu0 %v1769
        %1835 = vmatprep.subr.bf16.mxu0 %v1772
        %1836 = vmatpush1.bf16.msra.mxu0 %v1771
        %1837 = vmatprep.subr.bf16.mxu0 %v1774
        %1838 = vmatpush1.bf16.msra.mxu0 %v1773
        %1839 = vmatprep.subr.bf16.mxu0 %v1776
        %1840 = vmatpush1.bf16.msra.mxu0 %v1775
        %1841 = vmatprep.subr.bf16.mxu0 %v1778
        %1842 = vmatpush1.bf16.msra.mxu0 %v1777
        %1843 = vmatprep.subr.bf16.mxu0 %v1780
        %1844 = vmatpush1.bf16.msra.mxu0 %v1779
        %1845 = vmatprep.subr.bf16.mxu0 %v1782
        %1846 = vmatpush1.bf16.msra.mxu0 %v1781
        %1847 = vmatprep.subr.bf16.mxu0 %v1784
        %1848 = vmatpush1.bf16.msra.mxu0 %v1783
        %1849 = vmatprep.subr.bf16.mxu0 %v1786
        %1850 = vmatpush1.bf16.msra.mxu0 %v1785
        %1851 = vmatprep.subr.bf16.mxu0 %v1788
        %1852 = vmatpush1.bf16.msra.mxu0 %v1787
        %1853 = vmatprep.subr.bf16.mxu0 %v1790
        %1854 = vmatpush1.bf16.msra.mxu0 %v1789
        %1855 = vmatprep.subr.bf16.mxu0 %v1792
        %1856 = vmatpush1.bf16.msra.mxu0 %v1791
        %1857 = vmatprep.mubr.bf16.mxu0 %v1662
        %1858 = vmatmul.mubr.bf16.gmra.mrb[0].mxu0 %v1659
        %v1859 = vpop.f32.mrb[0].mxu0
        %v1860 = vadd.f32 0.0, %v1859
        %v1861 = vpop.f32.mrb[0].mxu0
        %v1862 = vadd.f32 0.0, %v1861
        %v1863 = vpop.f32.mrb[0].mxu0
        %v1864 = vadd.f32 0.0, %v1863
        %v1865 = vpop.f32.mrb[0].mxu0
        %v1866 = vadd.f32 0.0, %v1865
        %1867 = vdwg.mxu0
        %v1868 = vadd.f32 %v1604, %v1860
        %v1869 = vadd.f32 %v1606, %v1862
        %v1870 = vadd.f32 %v1608, %v1864
        %v1871 = vadd.f32 %v1610, %v1866
        %v1873 = vlaneseq
        %v1874 = vshrl.u32 %v1873, 7
        %v1875 = vsub.s32 0, %v1874
        %v1876 = vrot.slane %v250, %v1875
        %v1877 = vlaneseq
        %v1878 = vshrl.u32 %v1877, 7
        %v1879 = vsub.s32 1, %v1878
        %v1880 = vrot.slane %v250, %v1879
        %v1883 = vmul.f32 %v1868, %v1876
        %v1884 = vmul.f32 %v1869, %v1880
        %v1885 = vmul.f32 %v1870, %v1876
        %v1886 = vmul.f32 %v1871, %v1880
        %v1888 = vlaneseq
        %v1889 = vshrl.u32 %v1888, 7
        %v1890 = vsub.s32 0, %v1889
        %v1891 = vrot.slane %v252, %v1890
        %v1892 = vlaneseq
        %v1893 = vshrl.u32 %v1892, 7
        %v1894 = vsub.s32 1, %v1893
        %v1895 = vrot.slane %v252, %v1894
        %v1898 = vadd.f32 %v1883, %v1891
        %v1899 = vadd.f32 %v1884, %v1895
        %v1900 = vadd.f32 %v1885, %v1891
        %v1901 = vadd.f32 %v1886, %v1895
        %v1902 = vadd.f32 %v1898, %v257
        %v1903 = vadd.f32 %v1899, %v258
        %v1904 = vadd.f32 %v1900, %v259
        %v1905 = vadd.f32 %v1901, %v260
        %v1906 = vmul.f32 %v1902, 0.01
        %v1907 = vmul.f32 %v1903, 0.01
        %v1908 = vmul.f32 %v1904, 0.01
        %v1909 = vmul.f32 %v1905, 0.01
        %v1910 = vmax.f32 %v1902, %v1906
        %v1911 = vmax.f32 %v1903, %v1907
        %v1912 = vmax.f32 %v1904, %v1908
        %v1913 = vmax.f32 %v1905, %v1909
        %1914 = vst [vmem:[%s244] sm:$0xff] %v1910
        %1915 = vst [vmem:[%s244 + $0x8] sm:$0xff] %v1911
        %1916 = vst [vmem:[%s244 + $0x10] sm:$0xff] %v1912
        %1917 = vst [vmem:[%s244 + $0x18] sm:$0xff] %v1913
        %s1918 = sand.u32 %s119, 1
        %s1919 = scalar_lea.sflag [#allocation6], %s1918
        %s1920 = sand.u32 %s119, 1
        %s1921 = smul.addr %s1920, 32
        %s1922 = scalar_lea.vmem [#allocation10], %s1921
        // Predicated region
        $region49: #{tpu_custom_call.1} parent=35 // pred_check
          %p1923 = pneg %p129
        $region50: #{tpu_custom_call.1} parent=35 // pred_check_branch
          %1925 = sbr.rel (%p1923) target = $region52
        $region51: #{tpu_custom_call.1} parent=35 // pred_region
          %s1927 = ssub.s32 512, 512
          %1928 = vsyncadd %s1919, %s1927
          %s1929 = smul.addr %s22, 4
          %s1930 = smul.addr %s1929, 128
          %s1931 = scalar_lea.hbm %s4, %s1930
          %s1932 = sshll.u32 %s1922, 4
          %s1933 = int_to_ptr.vmem [resolvable:$true] %s1932
          %1938 = dma.vmem_to_hbm [thread:$0]  %s1933, 512, %s1931, %s1919, 256, 256, 16
        $region52: #{tpu_custom_call.1} parent=35 // pred_fallthru
          _
      $region36: #{tpu_custom_call.1} parent=5 // pred_fallthru
        _
      %p1939 = scmp.le.s32.totalorder 2, %s17
      // Predicated region
      $region53: #{tpu_custom_call.1} parent=5 // pred_check
        %p1940 = pneg %p1939
      $region54: #{tpu_custom_call.1} parent=5 // pred_check_branch
        %1942 = sbr.rel (%p1940) target = $region56
      $region55: #{tpu_custom_call.1} parent=5 // pred_region
        %s1943 = ssub.s32 %s17, 2
        // Predicated region
        $region57: #{tpu_custom_call.1} parent=55 // pred_check
          %p1944 = pneg %p135
        $region58: #{tpu_custom_call.1} parent=55 // pred_check_branch
          %1946 = sbr.rel (%p1944) target = $region60
        $region59: #{tpu_custom_call.1} parent=55 // pred_region
          %s1947 = sand.u32 %s120, 1
          %s1948 = scalar_lea.sflag [#allocation6], %s1947
          %s1949 = sand.u32 %s120, 1
          %s1950 = smul.addr %s1949, 32
          %s1951 = scalar_lea.vmem [#allocation10], %s1950
          %1952 = dma.done %s1948, 512
        $region60: #{tpu_custom_call.1} parent=55 // pred_fallthru
          _
      $region56: #{tpu_custom_call.1} parent=5 // pred_fallthru
        _
    $region6: #{tpu_custom_call.1} parent=1 // loop_footer
      %s21 = sadd.s32 1, %s17
    $region7: #{tpu_custom_call.1} parent=1 // loop_footer_branch
      %16 = sbr.rel target = $region3
    $region8: #{tpu_custom_call.1} parent=1 // loop_exit
      _
    %1953 = vsyncpa [#allocation5], 1
    %s1954 = scalar_lea.sflag [#allocation5], 1
    %1955 = vsyncpa %s1954, 1
    %1956 = vsyncpa [#allocation8], 1
    %1957 = vsyncpa [#allocation6], 1
    %s1958 = scalar_lea.sflag [#allocation6], 1
    %1959 = vsyncpa %s1958, 1

</llo_original>
